<compile_context>
chip_gen: v7x
topology: tpu7x:2x2x1
jax: 0.10.0
libtpu: 0.0.40
codegen_flags: <defaults>
</compile_context>

<pallas_src>
import numpy as np
import jax
import jax.numpy as jnp
from jax.experimental import pallas as pl
from jax.experimental.pallas import tpu as pltpu

IGNORE_LABEL = 255


# ----------------------------------------------------------------------------
# helpers
# ----------------------------------------------------------------------------
def _round_up(x, m):
    return ((x + m - 1) // m) * m


def _pick_tile(n, candidates=(2048, 1024, 512, 256, 128)):
    for t in candidates:
        if n % t == 0:
            return t
    return 128  # unreachable: n is always padded to a multiple of 128


# ----------------------------------------------------------------------------
# Kernel 1: weighted cross-entropy with ignore_index.
# Layout: logits (C, T) per tile, labels (1, T), weight (C, 1).
# Accumulates num/den into resident (1,1) output blocks across the grid.
# ----------------------------------------------------------------------------
def _ce_kernel(logits_ref, labels_ref, weight_ref, num_ref, den_ref):
    @pl.when(pl.program_id(0) == 0)
    def _init():
        num_ref[...] = jnp.zeros_like(num_ref)
        den_ref[...] = jnp.zeros_like(den_ref)

    x = logits_ref[...].astype(jnp.float32)            # (C, T)
    lab = labels_ref[...]                               # (1, T) int32
    w = weight_ref[...].astype(jnp.float32)             # (C, 1)
    c, t = x.shape

    valid = lab != IGNORE_LABEL                          # (1, T)
    m = jnp.max(x, axis=0, keepdims=True)                # (1, T)
    lse = m + jnp.log(jnp.sum(jnp.exp(x - m), axis=0, keepdims=True))

    cls = jax.lax.broadcasted_iota(jnp.int32, (c, t), 0)
    onehot = (cls == lab).astype(jnp.float32)            # (C, T)
    logit_t = jnp.sum(onehot * x, axis=0, keepdims=True)  # (1, T)
    w_t = jnp.sum(onehot * w, axis=0, keepdims=True)      # (1, T)
    vf = valid.astype(jnp.float32)

    num_ref[...] += jnp.sum(w_t * (lse - logit_t) * vf, keepdims=True)   # (1,1)
    den_ref[...] += jnp.sum(w_t * vf, keepdims=True)                      # (1,1)


# ----------------------------------------------------------------------------
# Kernel 2: Lovasz prep — softmax over the class (sublane) axis and negated errors
#           -|fg - p_c| (0 for ignored pixels).  Negated so that an ascending
#           lax.sort in the wrapper yields the required descending error order.
# ----------------------------------------------------------------------------
def _lovasz_prep_kernel(logits_ref, labels_ref, nerr_ref):
    x = logits_ref[0].astype(jnp.float32)                # (C, T)
    lab = labels_ref[...]                                 # (1, T) int32
    c, t = x.shape

    m = jnp.max(x, axis=0, keepdims=True)
    e = jnp.exp(x - m)
    prob = e * pl.reciprocal(jnp.sum(e, axis=0, keepdims=True), approx=True)

    cls = jax.lax.broadcasted_iota(jnp.int32, (c, t), 0)
    valid = lab != IGNORE_LABEL                            # (1, T)
    fg = (cls == lab).astype(jnp.float32)                  # IGNORE never matches a class
    nerr_ref[...] = jnp.where(valid, -jnp.abs(fg - prob), 0.0)


# ----------------------------------------------------------------------------
# Kernel 3: blocked Lovasz-gradient scan.  Inputs are sorted (err descending) per
#           class row.  fg is rebuilt from the sorted labels; cumsum(fg) is an
#           in-tile log-step roll+add plus a (C,1) carry; cumsum(1-fg) uses the
#           identity rank - cumsum(fg).  The previous-jac carry feeds grad at
#           every tile boundary.
# ----------------------------------------------------------------------------
def _lovasz_scan_kernel(nerr_ref, lab_ref, gts_ref, loss_ref, cfg_ref, cjac_ref):
    pid = pl.program_id(0)

    @pl.when(pid == 0)
    def _init():
        loss_ref[...] = jnp.zeros_like(loss_ref)
        cfg_ref[...] = jnp.zeros_like(cfg_ref)
        cjac_ref[...] = jnp.zeros_like(cjac_ref)

    nerr = nerr_ref[...]                                   # (C, T) = -err, sorted ascending
    lab = lab_ref[...]                                     # (C, T) int32 (same permutation)
    c, t = nerr.shape
    cls = jax.lax.broadcasted_iota(jnp.int32, (c, t), 0)
    lane = jax.lax.broadcasted_iota(jnp.int32, (c, t), 1)
    fg = (lab == cls).astype(jnp.float32)

    # in-tile inclusive prefix sum along lanes (log2(T) roll+add steps)
    cs = fg
    s = 1
    while s < t:
        cs = cs + jnp.where(lane >= s, pltpu.roll(cs, shift=s, axis=1), 0.0)
        s *= 2
    cum_fg = cs + cfg_ref[...]                             # add carry from previous tiles

    gts = gts_ref[...]                                     # (C, 1)
    pos = (pid * t + lane + 1).astype(jnp.float32)         # global 1-based rank
    inter = gts - cum_fg
    union = gts + (pos - cum_fg)                           # = gts + cumsum(1 - fg)
    jac = 1.0 - inter * pl.reciprocal(union, approx=True)

    prev = jnp.where(lane == 0, cjac_ref[...], pltpu.roll(jac, shift=1, axis=1))
    grad = jac - prev                                      # lovasz_grad (grad[0] = jac[0])

    loss_ref[...] += jnp.sum((-nerr) * grad, axis=1, keepdims=True)   # (C, 1)

    last = lane == (t - 1)
    cfg_ref[...] = jnp.sum(jnp.where(last, cum_fg, 0.0), axis=1, keepdims=True)
    cjac_ref[...] = jnp.sum(jnp.where(last, jac, 0.0), axis=1, keepdims=True)


# ----------------------------------------------------------------------------
# Wrappers
# ----------------------------------------------------------------------------
def _ce_loss(pred_point, target_point, class_weight):
    n, c = pred_point.shape
    logits_t = pred_point.T                                 # (C, N) lane-dense
    labels = target_point.reshape(1, n).astype(jnp.int32)

    n_pad = _round_up(max(n, 128), 128)
    if n_pad != n:
        logits_t = jnp.pad(logits_t, ((0, 0), (0, n_pad - n)))
        labels = jnp.pad(labels, ((0, 0), (0, n_pad - n)), constant_values=IGNORE_LABEL)

    tile = _pick_tile(n_pad)
    nt = n_pad // tile
    w = class_weight.reshape(c, 1)

    num, den = pl.pallas_call(
        _ce_kernel,
        grid=(nt,),
        in_specs=[pl.BlockSpec((c, tile), lambda i: (0, i)),
                  pl.BlockSpec((1, tile), lambda i: (0, i)),
                  pl.BlockSpec((c, 1), lambda i: (0, 0))],
        out_specs=(pl.BlockSpec((1, 1), lambda i: (0, 0)),
                   pl.BlockSpec((1, 1), lambda i: (0, 0))),
        out_shape=(jax.ShapeDtypeStruct((1, 1), jnp.float32),
                   jax.ShapeDtypeStruct((1, 1), jnp.float32)),
        compiler_params=pltpu.CompilerParams(dimension_semantics=("arbitrary",)),
    )(logits_t, labels, w)

    num = num[0, 0]
    den = den[0, 0]
    return jnp.where(den > 0, num / jnp.maximum(den, 1e-12), 0.0)


def _lovasz_softmax_loss(pred_voxel, target_voxel):
    b, c, h, w = pred_voxel.shape
    hw = h * w
    logits = pred_voxel.reshape(b, c, hw)                    # free reshape, no transpose
    labels = target_voxel.reshape(b, hw).astype(jnp.int32)

    hwp = _round_up(max(hw, 128), 128)
    if hwp != hw:
        logits = jnp.pad(logits, ((0, 0), (0, 0), (0, hwp - hw)))
        labels = jnp.pad(labels, ((0, 0), (0, hwp - hw)), constant_values=IGNORE_LABEL)
    p = b * hwp
    labels_flat = labels.reshape(1, p)

    tile_hw = _pick_tile(hwp)
    nt = hwp // tile_hw

    nerr = pl.pallas_call(
        _lovasz_prep_kernel,
        grid=(b, nt),
        in_specs=[pl.BlockSpec((1, c, tile_hw), lambda bi, ti: (bi, 0, ti)),
                  pl.BlockSpec((1, tile_hw), lambda bi, ti: (0, bi * nt + ti))],
        out_specs=pl.BlockSpec((c, tile_hw), lambda bi, ti: (0, bi * nt + ti)),
        out_shape=jax.ShapeDtypeStruct((c, p), jnp.float32),
        compiler_params=pltpu.CompilerParams(dimension_semantics=("parallel", "parallel")),
    )(logits, labels_flat)

    # per-class foreground counts (needed up-front by the streaming scan)
    gts = jnp.sum(
        (labels_flat == jnp.arange(c, dtype=jnp.int32)[:, None]).astype(jnp.float32),
        axis=1, keepdims=True)                               # (C, 1)

    # TODO(synk): torch.sort (descending) has no Pallas TPU primitive; XLA lax.sort is
    # used here, carrying the labels as payload so fg is rebuilt inside kernel 3.
    labels_b = jnp.broadcast_to(labels_flat, (c, p))
    nerr_s, labels_s = jax.lax.sort((nerr, labels_b), dimension=1,
                                    is_stable=False, num_keys=1)

    tile_p = _pick_tile(p)
    ntp = p // tile_p

    per_class = pl.pallas_call(
        _lovasz_scan_kernel,
        grid=(ntp,),
        in_specs=[pl.BlockSpec((c, tile_p), lambda i: (0, i)),
                  pl.BlockSpec((c, tile_p), lambda i: (0, i)),
                  pl.BlockSpec((c, 1), lambda i: (0, 0))],
        out_specs=pl.BlockSpec((c, 1), lambda i: (0, 0)),
        out_shape=jax.ShapeDtypeStruct((c, 1), jnp.float32),
        scratch_shapes=[pltpu.VMEM((c, 1), jnp.float32),      # cum_fg carry
                        pltpu.VMEM((c, 1), jnp.float32)],     # previous-jac carry
        compiler_params=pltpu.CompilerParams(dimension_semantics=("arbitrary",)),
    )(nerr_s, labels_s, gts)

    present = (gts[:, 0] > 0).astype(jnp.float32)
    n_present = jnp.sum(present)
    return jnp.where(n_present > 0,
                     jnp.sum(per_class[:, 0] * present) / jnp.maximum(n_present, 1.0),
                     0.0)


@jax.jit
def loss_forward(pred_point, target_point, pred_voxel, target_voxel, class_weight):
    ce = _ce_loss(pred_point, target_point, class_weight)
    lov = _lovasz_softmax_loss(pred_voxel, target_voxel)
    return ce + lov


# ----------------------------------------------------------------------------
# Pure numpy reference (mirrors torch CrossEntropyLoss + Berman's lovasz_softmax)
# ----------------------------------------------------------------------------
def _ref_loss(pred_point, target_point, pred_voxel, target_voxel, weight, ignore=IGNORE_LABEL):
    x = np.asarray(pred_point, np.float64)
    y = np.asarray(target_point)
    w = np.asarray(weight, np.float64)
    num = den = 0.0
    for i in range(x.shape[0]):
        if y[i] == ignore:
            continue
        mx = x[i].max()
        lse = mx + np.log(np.exp(x[i] - mx).sum())
        num += w[y[i]] * (lse - x[i, y[i]])
        den += w[y[i]]
    ce = num / den if den > 0 else 0.0

    logits = np.asarray(pred_voxel, np.float64)
    b, c, h, wd = logits.shape
    probs = np.exp(logits - logits.max(1, keepdims=True))
    probs = probs / probs.sum(1, keepdims=True)
    probs = probs.transpose(0, 2, 3, 1).reshape(-1, c)
    labels = np.asarray(target_voxel).reshape(-1)
    m = labels != ignore
    probs, labels = probs[m], labels[m]
    losses = []
    for cc in range(c):
        fg = (labels == cc).astype(np.float64)
        if fg.sum() == 0:
            continue
        errors = np.abs(fg - probs[:, cc])
        order = np.argsort(-errors)
        es, fs = errors[order], fg[order]
        gts = fs.sum()
        inter = gts - np.cumsum(fs)
        union = gts + np.cumsum(1.0 - fs)
        jac = 1.0 - inter / union
        jac[1:] = jac[1:] - jac[:-1]
        losses.append(float(np.dot(es, jac)))
    lov = float(np.mean(losses)) if losses else 0.0
    return ce + lov


if __name__ == "__main__":
    key = jax.random.PRNGKey(0)
    k1, k2, k3, k4, k5, k6 = jax.random.split(key, 6)

    N, C = 128, 8          # points, classes
    B, H, W = 2, 16, 16    # voxel grid

    # deterministic per-class weights (stand-in for the `weight` buffer of the module)
    class_weight = 0.5 + 0.1 * jnp.arange(C, dtype=jnp.float32)

    pred_point = jax.random.normal(k1, (N, C), dtype=jnp.float32)
    target_point = jax.random.randint(k2, (N,), 0, C, dtype=jnp.int32)
    target_point = jnp.where(jax.random.uniform(k3, (N,)) < 0.1, IGNORE_LABEL, target_point)

    pred_voxel = jax.random.normal(k4, (B, C, H, W), dtype=jnp.float32)
    target_voxel = jax.random.randint(k5, (B, H, W), 0, C, dtype=jnp.int32)
    target_voxel = jnp.where(jax.random.uniform(k6, (B, H, W)) < 0.1, IGNORE_LABEL, target_voxel)

    out = loss_forward(pred_point, target_point, pred_voxel, target_voxel, class_weight)
    out = jax.block_until_ready(out)

    ref = _ref_loss(pred_point, target_point, pred_voxel, target_voxel, class_weight)
    assert np.allclose(float(out), ref, rtol=2e-3, atol=2e-3), (float(out), ref)

    print("KERNEL_OK")
</pallas_src>

<mosaic_0001>
module attributes {stable_mosaic.version = 11 : i64} {
  func.func @_ce_kernel(%arg0: i32, %arg1: memref<8x128xf32, #tpu.memory_space<vmem>>, %arg2: memref<1x128xi32, #tpu.memory_space<vmem>>, %arg3: memref<8x1xf32, #tpu.memory_space<vmem>>, %arg4: memref<1x1xf32, #tpu.memory_space<vmem>>, %arg5: memref<1x1xf32, #tpu.memory_space<vmem>>) attributes {dimension_semantics = [#tpu.dimension_semantics<arbitrary>], iteration_bounds = array<i64: 1>, scalar_prefetch = 0 : i64, scratch_operands = 0 : i64, tpu.core_type = #tpu.core_type<tc>, window_params = [{transform_indices = @transform_0, window_bounds = array<i64: 8, 128>}, {transform_indices = @transform_1, window_bounds = array<i64: 1, 128>}, {pipeline_mode = #tpu.pipeline_mode<synchronous>, transform_indices = @transform_2, window_bounds = array<i64: 8, 1>}, {pipeline_mode = #tpu.pipeline_mode<synchronous>, transform_indices = @transform_3, window_bounds = array<i64: 1, 1>}, {pipeline_mode = #tpu.pipeline_mode<synchronous>, transform_indices = @transform_4, window_bounds = array<i64: 1, 1>}]} {
    %c0_i32 = arith.constant 0 : i32
    %0 = arith.cmpi eq, %arg0, %c0_i32 : i32
    %1 = arith.extui %0 : i1 to i32
    %c0_i32_0 = arith.constant 0 : i32
    %2 = arith.cmpi ne, %1, %c0_i32_0 : i32
    scf.if %2 {
      %cst_19 = arith.constant 0.000000e+00 : f32
      %51 = vector.broadcast %cst_19 : f32 to vector<1x1xf32>
      %c0_20 = arith.constant 0 : index
      %c0_21 = arith.constant 0 : index
      %52 = vector.load %arg4[%c0_20, %c0_21] : memref<1x1xf32, #tpu.memory_space<vmem>>, vector<1x1xf32>
      tpu.vector_store %arg4[%c0_20, %c0_21], %51 {strides = array<i32>} : memref<1x1xf32, #tpu.memory_space<vmem>>, vector<1x1xf32>,
      %cst_22 = arith.constant 0.000000e+00 : f32
      %53 = vector.broadcast %cst_22 : f32 to vector<1x1xf32>
      %c0_23 = arith.constant 0 : index
      %c0_24 = arith.constant 0 : index
      %54 = vector.load %arg5[%c0_23, %c0_24] : memref<1x1xf32, #tpu.memory_space<vmem>>, vector<1x1xf32>
      tpu.vector_store %arg5[%c0_23, %c0_24], %53 {strides = array<i32>} : memref<1x1xf32, #tpu.memory_space<vmem>>, vector<1x1xf32>,
    } else {
    }
    %c0 = arith.constant 0 : index
    %c0_1 = arith.constant 0 : index
    %3 = vector.load %arg1[%c0, %c0_1] : memref<8x128xf32, #tpu.memory_space<vmem>>, vector<8x128xf32>
    %c0_2 = arith.constant 0 : index
    %c0_3 = arith.constant 0 : index
    %4 = vector.load %arg2[%c0_2, %c0_3] : memref<1x128xi32, #tpu.memory_space<vmem>>, vector<1x128xi32>
    %c0_4 = arith.constant 0 : index
    %c0_5 = arith.constant 0 : index
    %5 = vector.load %arg3[%c0_4, %c0_5] : memref<8x1xf32, #tpu.memory_space<vmem>>, vector<8x1xf32>
    %c255_i32 = arith.constant 255 : i32
    %6 = vector.broadcast %c255_i32 : i32 to vector<1x128xi32>
    %7 = arith.cmpi ne, %4, %6 : vector<1x128xi32>
    %cst = arith.constant dense<0xFF800000> : vector<128xf32>
    %8 = vector.multi_reduction <maximumf>, %3, %cst [0] : vector<8x128xf32> to vector<128xf32>
    %9 = vector.shape_cast %8 : vector<128xf32> to vector<1x128xf32>
    %10 = vector.broadcast %9 : vector<1x128xf32> to vector<8x128xf32>
    %11 = arith.subf %3, %10 : vector<8x128xf32>
    %12 = math.exp %11 : vector<8x128xf32>
    %cst_6 = arith.constant dense<0.000000e+00> : vector<128xf32>
    %13 = vector.multi_reduction <add>, %12, %cst_6 [0] : vector<8x128xf32> to vector<128xf32>
    %14 = vector.shape_cast %13 : vector<128xf32> to vector<1x128xf32>
    %15 = math.log %14 : vector<1x128xf32>
    %16 = arith.addf %9, %15 : vector<1x128xf32>
    %17 = tpu.iota {dimensions = array<i32: 0>} : vector<8x128xi32>
    %18 = vector.broadcast %4 : vector<1x128xi32> to vector<8x128xi32>
    %19 = arith.cmpi eq, %17, %18 : vector<8x128xi32>
    %20 = arith.extui %19 : vector<8x128xi1> to vector<8x128xi32>
    %21 = arith.sitofp %20 : vector<8x128xi32> to vector<8x128xf32>
    %22 = arith.mulf %21, %3 : vector<8x128xf32>
    %cst_7 = arith.constant dense<0.000000e+00> : vector<128xf32>
    %23 = vector.multi_reduction <add>, %22, %cst_7 [0] : vector<8x128xf32> to vector<128xf32>
    %24 = vector.shape_cast %23 : vector<128xf32> to vector<1x128xf32>
    %25 = vector.broadcast %5 : vector<8x1xf32> to vector<8x128xf32>
    %26 = arith.mulf %21, %25 : vector<8x128xf32>
    %cst_8 = arith.constant dense<0.000000e+00> : vector<128xf32>
    %27 = vector.multi_reduction <add>, %26, %cst_8 [0] : vector<8x128xf32> to vector<128xf32>
    %28 = vector.shape_cast %27 : vector<128xf32> to vector<1x128xf32>
    %29 = arith.extui %7 : vector<1x128xi1> to vector<1x128xi32>
    %30 = arith.sitofp %29 : vector<1x128xi32> to vector<1x128xf32>
    %c0_9 = arith.constant 0 : index
    %c0_10 = arith.constant 0 : index
    %31 = vector.load %arg4[%c0_9, %c0_10] : memref<1x1xf32, #tpu.memory_space<vmem>>, vector<1x1xf32>
    %32 = arith.subf %16, %24 : vector<1x128xf32>
    %33 = arith.mulf %28, %32 : vector<1x128xf32>
    %34 = arith.mulf %33, %30 : vector<1x128xf32>
    %35 = vector.shape_cast %34 : vector<1x128xf32> to vector<1x1x128xf32>
    %cst_11 = arith.constant dense<0.000000e+00> : vector<1xf32>
    %36 = vector.multi_reduction <add>, %35, %cst_11 [1, 2] : vector<1x1x128xf32> to vector<1xf32>
    %37 = vector.shape_cast %36 : vector<1xf32> to vector<1x1x1xf32>
    %38 = vector.extract %37[0, 0, 0] : f32 from vector<1x1x1xf32>
    %39 = vector.broadcast %38 : f32 to vector<1x1xf32>
    %40 = arith.addf %31, %39 : vector<1x1xf32>
    %c0_12 = arith.constant 0 : index
    %c0_13 = arith.constant 0 : index
    %41 = vector.load %arg4[%c0_12, %c0_13] : memref<1x1xf32, #tpu.memory_space<vmem>>, vector<1x1xf32>
    tpu.vector_store %arg4[%c0_12, %c0_13], %40 {strides = array<i32>} : memref<1x1xf32, #tpu.memory_space<vmem>>, vector<1x1xf32>,
    %c0_14 = arith.constant 0 : index
    %c0_15 = arith.constant 0 : index
    %42 = vector.load %arg5[%c0_14, %c0_15] : memref<1x1xf32, #tpu.memory_space<vmem>>, vector<1x1xf32>
    %43 = arith.mulf %28, %30 : vector<1x128xf32>
    %44 = vector.shape_cast %43 : vector<1x128xf32> to vector<1x1x128xf32>
    %cst_16 = arith.constant dense<0.000000e+00> : vector<1xf32>
    %45 = vector.multi_reduction <add>, %44, %cst_16 [1, 2] : vector<1x1x128xf32> to vector<1xf32>
    %46 = vector.shape_cast %45 : vector<1xf32> to vector<1x1x1xf32>
    %47 = vector.extract %46[0, 0, 0] : f32 from vector<1x1x1xf32>
    %48 = vector.broadcast %47 : f32 to vector<1x1xf32>
    %49 = arith.addf %42, %48 : vector<1x1xf32>
    %c0_17 = arith.constant 0 : index
    %c0_18 = arith.constant 0 : index
    %50 = vector.load %arg5[%c0_17, %c0_18] : memref<1x1xf32, #tpu.memory_space<vmem>>, vector<1x1xf32>
    tpu.vector_store %arg5[%c0_17, %c0_18], %49 {strides = array<i32>} : memref<1x1xf32, #tpu.memory_space<vmem>>, vector<1x1xf32>,
    return
  }
  func.func @transform_0(%arg0: i32) -> (i32, i32) {
    %c0_i32 = arith.constant 0 : i32
    %c0_i32_0 = arith.constant 0 : i32
    return %c0_i32, %arg0 : i32, i32
  }
  func.func @transform_1(%arg0: i32) -> (i32, i32) {
    %c0_i32 = arith.constant 0 : i32
    %c0_i32_0 = arith.constant 0 : i32
    return %c0_i32, %arg0 : i32, i32
  }
  func.func @transform_2(%arg0: i32) -> (i32, i32) {
    %c0_i32 = arith.constant 0 : i32
    %c0_i32_0 = arith.constant 0 : i32
    %c0_i32_1 = arith.constant 0 : i32
    return %c0_i32, %c0_i32_0 : i32, i32
  }
  func.func @transform_3(%arg0: i32) -> (i32, i32) {
    %c0_i32 = arith.constant 0 : i32
    %c0_i32_0 = arith.constant 0 : i32
    %c0_i32_1 = arith.constant 0 : i32
    return %c0_i32, %c0_i32_0 : i32, i32
  }
  func.func @transform_4(%arg0: i32) -> (i32, i32) {
    %c0_i32 = arith.constant 0 : i32
    %c0_i32_0 = arith.constant 0 : i32
    %c0_i32_1 = arith.constant 0 : i32
    return %c0_i32, %c0_i32_0 : i32, i32
  }
}

module attributes {stable_mosaic.version = 11 : i64} {
  func.func @_lovasz_prep_kernel(%arg0: i32, %arg1: i32, %arg2: memref<1x8x256xf32, #tpu.memory_space<vmem>>, %arg3: memref<1x256xi32, #tpu.memory_space<vmem>>, %arg4: memref<8x256xf32, #tpu.memory_space<vmem>>) attributes {dimension_semantics = [#tpu.dimension_semantics<parallel>, #tpu.dimension_semantics<parallel>], iteration_bounds = array<i64: 2, 1>, scalar_prefetch = 0 : i64, scratch_operands = 0 : i64, tpu.core_type = #tpu.core_type<tc>, window_params = [{transform_indices = @transform_0, window_bounds = array<i64: 1, 8, 256>}, {transform_indices = @transform_1, window_bounds = array<i64: 1, 256>}, {transform_indices = @transform_2, window_bounds = array<i64: 8, 256>}]} {
    %c0 = arith.constant 0 : index
    %c0_0 = arith.constant 0 : index
    %c0_1 = arith.constant 0 : index
    %0 = vector.load %arg2[%c0, %c0_0, %c0_1] : memref<1x8x256xf32, #tpu.memory_space<vmem>>, vector<1x8x256xf32>
    %1 = vector.shape_cast %0 : vector<1x8x256xf32> to vector<8x256xf32>
    %c0_2 = arith.constant 0 : index
    %c0_3 = arith.constant 0 : index
    %2 = vector.load %arg3[%c0_2, %c0_3] : memref<1x256xi32, #tpu.memory_space<vmem>>, vector<1x256xi32>
    %cst = arith.constant dense<0xFF800000> : vector<256xf32>
    %3 = vector.multi_reduction <maximumf>, %1, %cst [0] : vector<8x256xf32> to vector<256xf32>
    %4 = vector.shape_cast %3 : vector<256xf32> to vector<1x256xf32>
    %5 = vector.broadcast %4 : vector<1x256xf32> to vector<8x256xf32>
    %6 = arith.subf %1, %5 : vector<8x256xf32>
    %7 = math.exp %6 : vector<8x256xf32>
    %cst_4 = arith.constant dense<0.000000e+00> : vector<256xf32>
    %8 = vector.multi_reduction <add>, %7, %cst_4 [0] : vector<8x256xf32> to vector<256xf32>
    %9 = vector.shape_cast %8 : vector<256xf32> to vector<1x256xf32>
    %10 = tpu.reciprocal %9 {approx = true} : vector<1x256xf32> -> vector<1x256xf32>
    %11 = vector.broadcast %10 : vector<1x256xf32> to vector<8x256xf32>
    %12 = arith.mulf %7, %11 : vector<8x256xf32>
    %13 = tpu.iota {dimensions = array<i32: 0>} : vector<8x256xi32>
    %c255_i32 = arith.constant 255 : i32
    %14 = vector.broadcast %c255_i32 : i32 to vector<1x256xi32>
    %15 = arith.cmpi ne, %2, %14 : vector<1x256xi32>
    %16 = vector.broadcast %2 : vector<1x256xi32> to vector<8x256xi32>
    %17 = arith.cmpi eq, %13, %16 : vector<8x256xi32>
    %18 = arith.extui %17 : vector<8x256xi1> to vector<8x256xi32>
    %19 = arith.sitofp %18 : vector<8x256xi32> to vector<8x256xf32>
    %20 = arith.subf %19, %12 : vector<8x256xf32>
    %21 = math.absf %20 : vector<8x256xf32>
    %cst_5 = arith.constant 0.000000e+00 : f32
    %22 = vector.broadcast %cst_5 : f32 to vector<8x256xf32>
    %23 = arith.subf %22, %21 : vector<8x256xf32>
    %cst_6 = arith.constant 0.000000e+00 : f32
    %24 = vector.shape_cast %15 : vector<1x256xi1> to vector<1x256xi1>
    %25 = vector.broadcast %24 : vector<1x256xi1> to vector<8x256xi1>
    %26 = vector.broadcast %cst_6 : f32 to vector<8x256xf32>
    %27 = arith.select %25, %23, %26 : vector<8x256xi1>, vector<8x256xf32>
    %c0_7 = arith.constant 0 : index
    %c0_8 = arith.constant 0 : index
    %28 = vector.load %arg4[%c0_7, %c0_8] : memref<8x256xf32, #tpu.memory_space<vmem>>, vector<8x256xf32>
    tpu.vector_store %arg4[%c0_7, %c0_8], %27 {strides = array<i32>} : memref<8x256xf32, #tpu.memory_space<vmem>>, vector<8x256xf32>,
    return
  }
  func.func @transform_0(%arg0: i32, %arg1: i32) -> (i32, i32, i32) {
    %c0_i32 = arith.constant 0 : i32
    %c0_i32_0 = arith.constant 0 : i32
    return %arg0, %c0_i32, %arg1 : i32, i32, i32
  }
  func.func @transform_1(%arg0: i32, %arg1: i32) -> (i32, i32) {
    %c1_i32 = arith.constant 1 : i32
    %0 = arith.muli %arg0, %c1_i32 : i32
    %1 = arith.addi %0, %arg1 : i32
    %c0_i32 = arith.constant 0 : i32
    %c0_i32_0 = arith.constant 0 : i32
    return %c0_i32, %1 : i32, i32
  }
  func.func @transform_2(%arg0: i32, %arg1: i32) -> (i32, i32) {
    %c1_i32 = arith.constant 1 : i32
    %0 = arith.muli %arg0, %c1_i32 : i32
    %1 = arith.addi %0, %arg1 : i32
    %c0_i32 = arith.constant 0 : i32
    %c0_i32_0 = arith.constant 0 : i32
    return %c0_i32, %1 : i32, i32
  }
}

module attributes {stable_mosaic.version = 11 : i64} {
  func.func @_lovasz_scan_kernel(%arg0: i32, %arg1: memref<8x512xf32, #tpu.memory_space<vmem>>, %arg2: memref<8x512xi32, #tpu.memory_space<vmem>>, %arg3: memref<8x1xf32, #tpu.memory_space<vmem>>, %arg4: memref<8x1xf32, #tpu.memory_space<vmem>>, %arg5: memref<8x1xf32, #tpu.memory_space<vmem>>, %arg6: memref<8x1xf32, #tpu.memory_space<vmem>>) attributes {dimension_semantics = [#tpu.dimension_semantics<arbitrary>], iteration_bounds = array<i64: 1>, scalar_prefetch = 0 : i64, scratch_operands = 2 : i64, tpu.core_type = #tpu.core_type<tc>, window_params = [{transform_indices = @transform_0, window_bounds = array<i64: 8, 512>}, {transform_indices = @transform_1, window_bounds = array<i64: 8, 512>}, {pipeline_mode = #tpu.pipeline_mode<synchronous>, transform_indices = @transform_2, window_bounds = array<i64: 8, 1>}, {pipeline_mode = #tpu.pipeline_mode<synchronous>, transform_indices = @transform_3, window_bounds = array<i64: 8, 1>}]} {
    %c0_i32 = arith.constant 0 : i32
    %0 = arith.cmpi eq, %arg0, %c0_i32 : i32
    %1 = arith.extui %0 : i1 to i32
    %c0_i32_0 = arith.constant 0 : i32
    %2 = arith.cmpi ne, %1, %c0_i32_0 : i32
    scf.if %2 {
      %cst_45 = arith.constant 0.000000e+00 : f32
      %111 = vector.broadcast %cst_45 : f32 to vector<8x1xf32>
      %c0_46 = arith.constant 0 : index
      %c0_47 = arith.constant 0 : index
      %112 = vector.load %arg4[%c0_46, %c0_47] : memref<8x1xf32, #tpu.memory_space<vmem>>, vector<8x1xf32>
      tpu.vector_store %arg4[%c0_46, %c0_47], %111 {strides = array<i32>} : memref<8x1xf32, #tpu.memory_space<vmem>>, vector<8x1xf32>,
      %cst_48 = arith.constant 0.000000e+00 : f32
      %113 = vector.broadcast %cst_48 : f32 to vector<8x1xf32>
      %c0_49 = arith.constant 0 : index
      %c0_50 = arith.constant 0 : index
      %114 = vector.load %arg5[%c0_49, %c0_50] : memref<8x1xf32, #tpu.memory_space<vmem>>, vector<8x1xf32>
      tpu.vector_store %arg5[%c0_49, %c0_50], %113 {strides = array<i32>} : memref<8x1xf32, #tpu.memory_space<vmem>>, vector<8x1xf32>,
      %cst_51 = arith.constant 0.000000e+00 : f32
      %115 = vector.broadcast %cst_51 : f32 to vector<8x1xf32>
      %c0_52 = arith.constant 0 : index
      %c0_53 = arith.constant 0 : index
      %116 = vector.load %arg6[%c0_52, %c0_53] : memref<8x1xf32, #tpu.memory_space<vmem>>, vector<8x1xf32>
      tpu.vector_store %arg6[%c0_52, %c0_53], %115 {strides = array<i32>} : memref<8x1xf32, #tpu.memory_space<vmem>>, vector<8x1xf32>,
    } else {
    }
    %c0 = arith.constant 0 : index
    %c0_1 = arith.constant 0 : index
    %3 = vector.load %arg1[%c0, %c0_1] : memref<8x512xf32, #tpu.memory_space<vmem>>, vector<8x512xf32>
    %c0_2 = arith.constant 0 : index
    %c0_3 = arith.constant 0 : index
    %4 = vector.load %arg2[%c0_2, %c0_3] : memref<8x512xi32, #tpu.memory_space<vmem>>, vector<8x512xi32>
    %5 = tpu.iota {dimensions = array<i32: 0>} : vector<8x512xi32>
    %6 = tpu.iota {dimensions = array<i32: 1>} : vector<8x512xi32>
    %7 = arith.cmpi eq, %4, %5 : vector<8x512xi32>
    %8 = arith.extui %7 : vector<8x512xi1> to vector<8x512xi32>
    %9 = arith.sitofp %8 : vector<8x512xi32> to vector<8x512xf32>
    %c1_i32 = arith.constant 1 : i32
    %10 = vector.broadcast %c1_i32 : i32 to vector<8x512xi32>
    %11 = arith.cmpi sge, %6, %10 : vector<8x512xi32>
    %c1_i32_4 = arith.constant 1 : i32
    %12 = tpu.dynamic_rotate %9 by %c1_i32_4 dim 1 : vector<8x512xf32>, i32 -> vector<8x512xf32>
    %cst = arith.constant 0.000000e+00 : f32
    %13 = vector.broadcast %cst : f32 to vector<8x512xf32>
    %14 = arith.select %11, %12, %13 : vector<8x512xi1>, vector<8x512xf32>
    %15 = arith.addf %9, %14 : vector<8x512xf32>
    %c2_i32 = arith.constant 2 : i32
    %16 = vector.broadcast %c2_i32 : i32 to vector<8x512xi32>
    %17 = arith.cmpi sge, %6, %16 : vector<8x512xi32>
    %c2_i32_5 = arith.constant 2 : i32
    %18 = tpu.dynamic_rotate %15 by %c2_i32_5 dim 1 : vector<8x512xf32>, i32 -> vector<8x512xf32>
    %cst_6 = arith.constant 0.000000e+00 : f32
    %19 = vector.broadcast %cst_6 : f32 to vector<8x512xf32>
    %20 = arith.select %17, %18, %19 : vector<8x512xi1>, vector<8x512xf32>
    %21 = arith.addf %15, %20 : vector<8x512xf32>
    %c4_i32 = arith.constant 4 : i32
    %22 = vector.broadcast %c4_i32 : i32 to vector<8x512xi32>
    %23 = arith.cmpi sge, %6, %22 : vector<8x512xi32>
    %c4_i32_7 = arith.constant 4 : i32
    %24 = tpu.dynamic_rotate %21 by %c4_i32_7 dim 1 : vector<8x512xf32>, i32 -> vector<8x512xf32>
    %cst_8 = arith.constant 0.000000e+00 : f32
    %25 = vector.broadcast %cst_8 : f32 to vector<8x512xf32>
    %26 = arith.select %23, %24, %25 : vector<8x512xi1>, vector<8x512xf32>
    %27 = arith.addf %21, %26 : vector<8x512xf32>
    %c8_i32 = arith.constant 8 : i32
    %28 = vector.broadcast %c8_i32 : i32 to vector<8x512xi32>
    %29 = arith.cmpi sge, %6, %28 : vector<8x512xi32>
    %c8_i32_9 = arith.constant 8 : i32
    %30 = tpu.dynamic_rotate %27 by %c8_i32_9 dim 1 : vector<8x512xf32>, i32 -> vector<8x512xf32>
    %cst_10 = arith.constant 0.000000e+00 : f32
    %31 = vector.broadcast %cst_10 : f32 to vector<8x512xf32>
    %32 = arith.select %29, %30, %31 : vector<8x512xi1>, vector<8x512xf32>
    %33 = arith.addf %27, %32 : vector<8x512xf32>
    %c16_i32 = arith.constant 16 : i32
    %34 = vector.broadcast %c16_i32 : i32 to vector<8x512xi32>
    %35 = arith.cmpi sge, %6, %34 : vector<8x512xi32>
    %c16_i32_11 = arith.constant 16 : i32
    %36 = tpu.dynamic_rotate %33 by %c16_i32_11 dim 1 : vector<8x512xf32>, i32 -> vector<8x512xf32>
    %cst_12 = arith.constant 0.000000e+00 : f32
    %37 = vector.broadcast %cst_12 : f32 to vector<8x512xf32>
    %38 = arith.select %35, %36, %37 : vector<8x512xi1>, vector<8x512xf32>
    %39 = arith.addf %33, %38 : vector<8x512xf32>
    %c32_i32 = arith.constant 32 : i32
    %40 = vector.broadcast %c32_i32 : i32 to vector<8x512xi32>
    %41 = arith.cmpi sge, %6, %40 : vector<8x512xi32>
    %c32_i32_13 = arith.constant 32 : i32
    %42 = tpu.dynamic_rotate %39 by %c32_i32_13 dim 1 : vector<8x512xf32>, i32 -> vector<8x512xf32>
    %cst_14 = arith.constant 0.000000e+00 : f32
    %43 = vector.broadcast %cst_14 : f32 to vector<8x512xf32>
    %44 = arith.select %41, %42, %43 : vector<8x512xi1>, vector<8x512xf32>
    %45 = arith.addf %39, %44 : vector<8x512xf32>
    %c64_i32 = arith.constant 64 : i32
    %46 = vector.broadcast %c64_i32 : i32 to vector<8x512xi32>
    %47 = arith.cmpi sge, %6, %46 : vector<8x512xi32>
    %c64_i32_15 = arith.constant 64 : i32
    %48 = tpu.dynamic_rotate %45 by %c64_i32_15 dim 1 : vector<8x512xf32>, i32 -> vector<8x512xf32>
    %cst_16 = arith.constant 0.000000e+00 : f32
    %49 = vector.broadcast %cst_16 : f32 to vector<8x512xf32>
    %50 = arith.select %47, %48, %49 : vector<8x512xi1>, vector<8x512xf32>
    %51 = arith.addf %45, %50 : vector<8x512xf32>
    %c128_i32 = arith.constant 128 : i32
    %52 = vector.broadcast %c128_i32 : i32 to vector<8x512xi32>
    %53 = arith.cmpi sge, %6, %52 : vector<8x512xi32>
    %c128_i32_17 = arith.constant 128 : i32
    %54 = tpu.dynamic_rotate %51 by %c128_i32_17 dim 1 : vector<8x512xf32>, i32 -> vector<8x512xf32>
    %cst_18 = arith.constant 0.000000e+00 : f32
    %55 = vector.broadcast %cst_18 : f32 to vector<8x512xf32>
    %56 = arith.select %53, %54, %55 : vector<8x512xi1>, vector<8x512xf32>
    %57 = arith.addf %51, %56 : vector<8x512xf32>
    %c256_i32 = arith.constant 256 : i32
    %58 = vector.broadcast %c256_i32 : i32 to vector<8x512xi32>
    %59 = arith.cmpi sge, %6, %58 : vector<8x512xi32>
    %c256_i32_19 = arith.constant 256 : i32
    %60 = tpu.dynamic_rotate %57 by %c256_i32_19 dim 1 : vector<8x512xf32>, i32 -> vector<8x512xf32>
    %cst_20 = arith.constant 0.000000e+00 : f32
    %61 = vector.broadcast %cst_20 : f32 to vector<8x512xf32>
    %62 = arith.select %59, %60, %61 : vector<8x512xi1>, vector<8x512xf32>
    %63 = arith.addf %57, %62 : vector<8x512xf32>
    %c0_21 = arith.constant 0 : index
    %c0_22 = arith.constant 0 : index
    %64 = vector.load %arg5[%c0_21, %c0_22] : memref<8x1xf32, #tpu.memory_space<vmem>>, vector<8x1xf32>
    %65 = vector.broadcast %64 : vector<8x1xf32> to vector<8x512xf32>
    %66 = arith.addf %63, %65 : vector<8x512xf32>
    %c0_23 = arith.constant 0 : index
    %c0_24 = arith.constant 0 : index
    %67 = vector.load %arg3[%c0_23, %c0_24] : memref<8x1xf32, #tpu.memory_space<vmem>>, vector<8x1xf32>
    %c512_i32 = arith.constant 512 : i32
    %68 = arith.muli %arg0, %c512_i32 : i32
    %69 = vector.broadcast %68 : i32 to vector<8x512xi32>
    %70 = arith.addi %69, %6 : vector<8x512xi32>
    %c1_i32_25 = arith.constant 1 : i32
    %71 = vector.broadcast %c1_i32_25 : i32 to vector<8x512xi32>
    %72 = arith.addi %70, %71 : vector<8x512xi32>
    %73 = arith.sitofp %72 : vector<8x512xi32> to vector<8x512xf32>
    %74 = vector.broadcast %67 : vector<8x1xf32> to vector<8x512xf32>
    %75 = arith.subf %74, %66 : vector<8x512xf32>
    %76 = arith.subf %73, %66 : vector<8x512xf32>
    %77 = vector.broadcast %67 : vector<8x1xf32> to vector<8x512xf32>
    %78 = arith.addf %77, %76 : vector<8x512xf32>
    %79 = tpu.reciprocal %78 {approx = true} : vector<8x512xf32> -> vector<8x512xf32>
    %80 = arith.mulf %75, %79 : vector<8x512xf32>
    %cst_26 = arith.constant 1.000000e+00 : f32
    %81 = vector.broadcast %cst_26 : f32 to vector<8x512xf32>
    %82 = arith.subf %81, %80 : vector<8x512xf32>
    %c0_i32_27 = arith.constant 0 : i32
    %83 = vector.broadcast %c0_i32_27 : i32 to vector<8x512xi32>
    %84 = arith.cmpi eq, %6, %83 : vector<8x512xi32>
    %c0_28 = arith.constant 0 : index
    %c0_29 = arith.constant 0 : index
    %85 = vector.load %arg6[%c0_28, %c0_29] : memref<8x1xf32, #tpu.memory_space<vmem>>, vector<8x1xf32>
    %c1_i32_30 = arith.constant 1 : i32
    %86 = tpu.dynamic_rotate %82 by %c1_i32_30 dim 1 : vector<8x512xf32>, i32 -> vector<8x512xf32>
    %87 = vector.shape_cast %85 : vector<8x1xf32> to vector<8x1xf32>
    %88 = vector.broadcast %87 : vector<8x1xf32> to vector<8x512xf32>
    %89 = arith.select %84, %88, %86 : vector<8x512xi1>, vector<8x512xf32>
    %90 = arith.subf %82, %89 : vector<8x512xf32>
    %c0_31 = arith.constant 0 : index
    %c0_32 = arith.constant 0 : index
    %91 = vector.load %arg4[%c0_31, %c0_32] : memref<8x1xf32, #tpu.memory_space<vmem>>, vector<8x1xf32>
    %cst_33 = arith.constant 0.000000e+00 : f32
    %92 = vector.broadcast %cst_33 : f32 to vector<8x512xf32>
    %93 = arith.subf %92, %3 : vector<8x512xf32>
    %94 = arith.mulf %93, %90 : vector<8x512xf32>
    %cst_34 = arith.constant dense<0.000000e+00> : vector<8xf32>
    %95 = vector.multi_reduction <add>, %94, %cst_34 [1] : vector<8x512xf32> to vector<8xf32>
    %96 = vector.shape_cast %95 : vector<8xf32> to vector<8x1xf32>
    %97 = arith.addf %91, %96 : vector<8x1xf32>
    %c0_35 = arith.constant 0 : index
    %c0_36 = arith.constant 0 : index
    %98 = vector.load %arg4[%c0_35, %c0_36] : memref<8x1xf32, #tpu.memory_space<vmem>>, vector<8x1xf32>
    tpu.vector_store %arg4[%c0_35, %c0_36], %97 {strides = array<i32>} : memref<8x1xf32, #tpu.memory_space<vmem>>, vector<8x1xf32>,
    %c511_i32 = arith.constant 511 : i32
    %99 = vector.broadcast %c511_i32 : i32 to vector<8x512xi32>
    %100 = arith.cmpi eq, %6, %99 : vector<8x512xi32>
    %cst_37 = arith.constant 0.000000e+00 : f32
    %101 = vector.broadcast %cst_37 : f32 to vector<8x512xf32>
    %102 = arith.select %100, %66, %101 : vector<8x512xi1>, vector<8x512xf32>
    %cst_38 = arith.constant dense<0.000000e+00> : vector<8xf32>
    %103 = vector.multi_reduction <add>, %102, %cst_38 [1] : vector<8x512xf32> to vector<8xf32>
    %104 = vector.shape_cast %103 : vector<8xf32> to vector<8x1xf32>
    %c0_39 = arith.constant 0 : index
    %c0_40 = arith.constant 0 : index
    %105 = vector.load %arg5[%c0_39, %c0_40] : memref<8x1xf32, #tpu.memory_space<vmem>>, vector<8x1xf32>
    tpu.vector_store %arg5[%c0_39, %c0_40], %104 {strides = array<i32>} : memref<8x1xf32, #tpu.memory_space<vmem>>, vector<8x1xf32>,
    %cst_41 = arith.constant 0.000000e+00 : f32
    %106 = vector.broadcast %cst_41 : f32 to vector<8x512xf32>
    %107 = arith.select %100, %82, %106 : vector<8x512xi1>, vector<8x512xf32>
    %cst_42 = arith.constant dense<0.000000e+00> : vector<8xf32>
    %108 = vector.multi_reduction <add>, %107, %cst_42 [1] : vector<8x512xf32> to vector<8xf32>
    %109 = vector.shape_cast %108 : vector<8xf32> to vector<8x1xf32>
    %c0_43 = arith.constant 0 : index
    %c0_44 = arith.constant 0 : index
    %110 = vector.load %arg6[%c0_43, %c0_44] : memref<8x1xf32, #tpu.memory_space<vmem>>, vector<8x1xf32>
    tpu.vector_store %arg6[%c0_43, %c0_44], %109 {strides = array<i32>} : memref<8x1xf32, #tpu.memory_space<vmem>>, vector<8x1xf32>,
    return
  }
  func.func @transform_0(%arg0: i32) -> (i32, i32) {
    %c0_i32 = arith.constant 0 : i32
    %c0_i32_0 = arith.constant 0 : i32
    return %c0_i32, %arg0 : i32, i32
  }
  func.func @transform_1(%arg0: i32) -> (i32, i32) {
    %c0_i32 = arith.constant 0 : i32
    %c0_i32_0 = arith.constant 0 : i32
    return %c0_i32, %arg0 : i32, i32
  }
  func.func @transform_2(%arg0: i32) -> (i32, i32) {
    %c0_i32 = arith.constant 0 : i32
    %c0_i32_0 = arith.constant 0 : i32
    %c0_i32_1 = arith.constant 0 : i32
    return %c0_i32, %c0_i32_0 : i32, i32
  }
  func.func @transform_3(%arg0: i32) -> (i32, i32) {
    %c0_i32 = arith.constant 0 : i32
    %c0_i32_0 = arith.constant 0 : i32
    %c0_i32_1 = arith.constant 0 : i32
    return %c0_i32, %c0_i32_0 : i32, i32
  }
}

</mosaic_0001>

<llo_original>
// kernel: eq.12
$region0: #{eq.12}
  %s0 = inlined_call_operand.vmem [shape: s32[2,16,16], index: 0, kind: input, shape index: {}]
  %s1 = inlined_call_operand.vmem [shape: s32[512], index: 1, kind: output, shape index: {}]
  $region1: #{eq.12} parent=0
    #allocation0 [shape = 'u8[4096]{0}', space=vmem, size = 0x1000, scoped, tag = 'scoped mem for output reshape']
    %v2 = vld [vmem:[%s0] ss:$8 sm:$0xf]
    %vm3 = vcmask 130048
    %4 = vst.msk [vmem:[#allocation0] sm:$0xf] %vm3, %v2
    %s5 = scalar_lea.vmem %s0, 7
    %v6 = vld [vmem:[%s5] ss:$8 sm:$0xf]
    %7 = vrot.lane.b32.xlu0 %v6, 112
    %v8 = vpop.permute.xlu0 %7
    %vm9 = vcmask 1048448
    %10 = vst.msk [vmem:[#allocation0] sm:$0xf] %vm9, %v8
    %s11 = scalar_lea.vmem %s0, 6
    %v12 = vld [vmem:[%s11] ss:$8 sm:$0xf]
    %13 = vrot.lane.b32.xlu0 %v12, 96
    %v14 = vpop.permute.xlu0 %13
    %vm15 = vcmask 917248
    %16 = vst.msk [vmem:[#allocation0] sm:$0xf] %vm15, %v14
    %s17 = scalar_lea.vmem %s0, 5
    %v18 = vld [vmem:[%s17] ss:$8 sm:$0xf]
    %19 = vrot.lane.b32.xlu0 %v18, 80
    %v20 = vpop.permute.xlu0 %19
    %vm21 = vcmask 786048
    %22 = vst.msk [vmem:[#allocation0] sm:$0xf] %vm21, %v20
    %s23 = scalar_lea.vmem %s0, 4
    %v24 = vld [vmem:[%s23] ss:$8 sm:$0xf]
    %25 = vrot.lane.b32.xlu0 %v24, 64
    %v26 = vpop.permute.xlu0 %25
    %vm27 = vcmask 654848
    %28 = vst.msk [vmem:[#allocation0] sm:$0xf] %vm27, %v26
    %s29 = scalar_lea.vmem %s0, 3
    %v30 = vld [vmem:[%s29] ss:$8 sm:$0xf]
    %31 = vrot.lane.b32.xlu0 %v30, 48
    %v32 = vpop.permute.xlu0 %31
    %vm33 = vcmask 523648
    %34 = vst.msk [vmem:[#allocation0] sm:$0xf] %vm33, %v32
    %s35 = scalar_lea.vmem %s0, 2
    %v36 = vld [vmem:[%s35] ss:$8 sm:$0xf]
    %37 = vrot.lane.b32.xlu0 %v36, 32
    %v38 = vpop.permute.xlu0 %37
    %vm39 = vcmask 392448
    %40 = vst.msk [vmem:[#allocation0] sm:$0xf] %vm39, %v38
    %s41 = scalar_lea.vmem %s0, 1
    %v42 = vld [vmem:[%s41] ss:$8 sm:$0xf]
    %43 = vrot.lane.b32.xlu0 %v42, 16
    %v44 = vpop.permute.xlu0 %43
    %vm45 = vcmask 261248
    %46 = vst.msk [vmem:[#allocation0] sm:$0xf] %vm45, %v44
    %s48 = sshllo.u32 0, 4
    %v50 = vld [vmem:[#allocation0] sm:%s48]
    %s51 = sshllo.u32 0, 4
    %52 = vst [vmem:[%s1] sm:%s51] %v50

// kernel: eq.13
$region0: #{eq.13}
  #allocation0 [shape = 's32[1]{0}', space=sflag, size = 0x4, scoped, tag = 'scoped memory for eq.13']
  %s0 = inlined_call_operand.vmem [shape: s32[512], index: 0, kind: input, shape index: {}]
  %s1 = inlined_call_operand.vmem [shape: s32[8,512], index: 1, kind: output, shape index: {}]
  // Predicated region
  $region2: #{eq.13} parent=0 // pred_check
    _
  $region3: #{eq.13} parent=0 // pred_check_branch
    %3 = sbr.rel (0) target = $region5
  $region4: #{eq.13} parent=0 // pred_region
    _
  $region5: #{eq.13} parent=0 // pred_fallthru
    _
  %v4 = vld [vmem:[%s0] ss:$0 sm:$0xff]
  %5 = vst [vmem:[%s1] sm:$0xff] %v4
  %s6 = scalar_lea.vmem %s0, 1
  %v7 = vld [vmem:[%s6] ss:$0 sm:$0xff]
  %s8 = scalar_lea.vmem %s1, 8
  %9 = vst [vmem:[%s8] sm:$0xff] %v7
  %s10 = scalar_lea.vmem %s0, 2
  %v11 = vld [vmem:[%s10] ss:$0 sm:$0xff]
  %s12 = scalar_lea.vmem %s1, 16
  %13 = vst [vmem:[%s12] sm:$0xff] %v11
  %s14 = scalar_lea.vmem %s0, 3
  %v15 = vld [vmem:[%s14] ss:$0 sm:$0xff]
  %s16 = scalar_lea.vmem %s1, 24
  %17 = vst [vmem:[%s16] sm:$0xff] %v15

// kernel: loss_forward.3
$region0: #{loss_forward.3}
  #allocation0 [shape = 'u32[]', space=smem, size = 0x4, offset = 0x4, fixed_abs, tag = 'smem constant byte address 0x4 - core index']
  #allocation1 [shape = 'u32[144,128]{1,0:T(1,128)}', space=vmem, size = 0x12000, scoped, tag = 'internal scratch']
  %s0 = inlined_call_operand.vmem [shape: f32[8,128], index: 0, kind: input, shape index: {}]
  %s1 = inlined_call_operand.vmem [shape: s32[1,128], index: 1, kind: input, shape index: {}]
  %s2 = inlined_call_operand.vmem [shape: f32[8,1], index: 2, kind: input, shape index: {}]
  %s3 = inlined_call_operand.hbm [shape: f32[1,1], index: 3, kind: output, shape index: {0}]
  %s4 = inlined_call_operand.hbm [shape: f32[1,1], index: 4, kind: output, shape index: {1}]
  %5 = xla_tuple %s3, %s4
  %s6 = sld [smem:[#allocation0]]
  $region34: #{loss_forward.3} parent=0
    _
  %s8 = ssub.s32 1, %s6
  %s9 = scalar_select 0, %s8, %s6
  $region1: #{loss_forward.3} parent=0
    #allocation2 [shape = 'u8[512]{0}', space=vmem, size = 0x400, scoped, tag = 'output window, operand 0, single buffered']
    #allocation3 [shape = 's32[1]{0}', space=sflag, size = 0x4, scoped, tag = 'scoped memory for loss_forward.3']
    #allocation4 [shape = 'u8[512]{0}', space=vmem, size = 0x400, scoped, tag = 'output window, operand 1, single buffered']
    #allocation5 [shape = 's32[1]{0}', space=sflag, size = 0x4, scoped, tag = 'scoped memory for loss_forward.3']
    %10 = vsyncpa [#allocation3], 0
    %11 = vsyncpa [#allocation5], 0
    // Predicated region
    $region2: #{loss_forward.3} parent=1 // pred_check
      _
    $region3: #{loss_forward.3} parent=1 // pred_check_branch
      %13 = sbr.rel (0) target = $region5
    $region4: #{loss_forward.3} parent=1 // pred_region
      _
    $region5: #{loss_forward.3} parent=1 // pred_fallthru
      _
    // Predicated region
    $region6: #{loss_forward.3} parent=1 // pred_check
      _
    $region7: #{loss_forward.3} parent=1 // pred_check_branch
      %15 = sbr.rel (0) target = $region9
    $region8: #{loss_forward.3} parent=1 // pred_region
      _
    $region9: #{loss_forward.3} parent=1 // pred_fallthru
      _
    // Predicated region
    $region10: #{loss_forward.3} parent=1 // pred_check
      _
    $region11: #{loss_forward.3} parent=1 // pred_check_branch
      %17 = sbr.rel (0) target = $region13
    $region12: #{loss_forward.3} parent=1 // pred_region
      _
    $region13: #{loss_forward.3} parent=1 // pred_fallthru
      _
    %p18 = scmp.eq.s32.totalorder 0, 0
    // Predicated region
    $region14: #{loss_forward.3} parent=1 // pred_check
      %p19 = pneg %p18
    $region15: #{loss_forward.3} parent=1 // pred_check_branch
      %21 = sbr.rel (%p19) target = $region17
    $region16: #{loss_forward.3} parent=1 // pred_region
      %vm22 = vcmask 0
      %23 = vst.msk [vmem:[#allocation2] sm:$0x1] %vm22, 0.0
      %24 = vst.msk [vmem:[#allocation4] sm:$0x1] %vm22, 0.0
    $region17: #{loss_forward.3} parent=1 // pred_fallthru
      _
    %v25 = vld [vmem:[%s0] sm:$0xff]
    %v26 = vld [vmem:[%s1] sm:$0x1]
    %v27 = vld [vmem:[%s2] sm:$0xff]
    %vm28 = vcmp.ne.s32.totalorder %v26, 255
    %v29 = vrot.slane %v25, 4
    %v30 = vmax.f32 %v25, %v29
    %v31 = vrot.slane %v30, 2
    %v32 = vmax.f32 %v30, %v31
    %v33 = vrot.slane %v32, 1
    %v34 = vmax.f32 %v32, %v33
    %v35 = vsub.f32 %v25, %v34
    %v36 = vmul.f32 %v35, 1.442695
    %v37 = vpow.pop %v36
    %v38 = vrot.slane %v37, 4
    %v39 = vadd.f32 %v37, %v38
    %v40 = vrot.slane %v39, 2
    %v41 = vadd.f32 %v39, %v40
    %v42 = vrot.slane %v41, 1
    %v43 = vadd.f32 %v41, %v42
    %v44 = vlog2.pop %v43
    %v45 = vmul.f32 %v44, 0.6931472
    %v46 = vadd.f32 %v34, %v45
    %v47 = vlaneseq
    %v48 = vshrl.u32 %v47, 7
    %v49 = vlaneseq
    %v50 = vshrl.u32 %v49, 7
    %v51 = vsub.s32 0, %v50
    %v52 = vrot.slane %v26, %v51
    %vm53 = vcmp.eq.s32.totalorder %v48, %v52
    %v54 = vsel %vm53, 1, 0
    %v55 = vcvt.s32.f32 %v54
    %v56 = vmul.f32 %v55, %v25
    %v57 = vrot.slane %v56, 4
    %v58 = vadd.f32 %v56, %v57
    %v59 = vrot.slane %v58, 2
    %v60 = vadd.f32 %v58, %v59
    %v61 = vrot.slane %v60, 1
    %v62 = vadd.f32 %v60, %v61
    %64 = vset.pattern.permute.xlu0 0
    %65 = vperm.xlu0 %64, %v27
    %v66 = vpop.permute.xlu0 %65
    %v68 = vmul.f32 %v55, %v66
    %v69 = vrot.slane %v68, 4
    %v70 = vadd.f32 %v68, %v69
    %v71 = vrot.slane %v70, 2
    %v72 = vadd.f32 %v70, %v71
    %v73 = vrot.slane %v72, 1
    %v74 = vadd.f32 %v72, %v73
    %v75 = vsel %vm28, 1, 0
    %v76 = vcvt.s32.f32 %v75
    %v77 = vld [vmem:[#allocation2] sm:$0x1]
    %v78 = vsub.f32 %v46, %v62
    %v79 = vmul.f32 %v74, %v78
    %v80 = vmul.f32 %v79, %v76
    %vm81 = vcmask 1040384
    %v82 = vsel %vm81, %v80, 0.0
    %83 = vadd.xlane.f32.xlu0 %v82
    %v84 = vpop.xlane.xlu0 %83
    %v85 = vrot.slane %v84, 4
    %v86 = vadd.f32 %v84, %v85
    %v87 = vrot.slane %v86, 2
    %v88 = vadd.f32 %v86, %v87
    %v89 = vrot.slane %v88, 1
    %v90 = vadd.f32 %v88, %v89
    %s91 = vtos %v90
    %v92 = vstv %s91
    %v93 = vadd.f32 %v77, %v92
    %vm94 = vcmask 0
    %95 = vst.msk [vmem:[#allocation2] sm:$0x1] %vm94, %v93
    %v96 = vld [vmem:[#allocation4] sm:$0x1]
    %v97 = vmul.f32 %v74, %v76
    %v98 = vsel %vm81, %v97, 0.0
    %99 = vadd.xlane.f32.xlu0 %v98
    %v100 = vpop.xlane.xlu0 %99
    %v101 = vrot.slane %v100, 4
    %v102 = vadd.f32 %v100, %v101
    %v103 = vrot.slane %v102, 2
    %v104 = vadd.f32 %v102, %v103
    %v105 = vrot.slane %v104, 1
    %v106 = vadd.f32 %v104, %v105
    %s107 = vtos %v106
    %v108 = vstv %s107
    %v109 = vadd.f32 %v96, %v108
    %110 = vst.msk [vmem:[#allocation4] sm:$0x1] %vm94, %v109
    // Predicated region
    $region18: #{loss_forward.3} parent=1 // pred_check
      _
    $region19: #{loss_forward.3} parent=1 // pred_check_branch
      %112 = sbr.rel (0) target = $region21
    $region20: #{loss_forward.3} parent=1 // pred_region
      %s114 = ssub.s32 16, 16
      %115 = vsyncadd [#allocation3], %s114
      %s117 = sshll.u32 [#allocation2], 4
      %s118 = int_to_ptr.vmem [resolvable:$true] %s117
      %120 = dma.vmem_to_hbm [thread:$0]  %s118, 16, %s3, [#allocation3]
    $region21: #{loss_forward.3} parent=1 // pred_fallthru
      _
    // Predicated region
    $region22: #{loss_forward.3} parent=1 // pred_check
      _
    $region23: #{loss_forward.3} parent=1 // pred_check_branch
      %122 = sbr.rel (0) target = $region25
    $region24: #{loss_forward.3} parent=1 // pred_region
      %s124 = ssub.s32 16, 16
      %125 = vsyncadd [#allocation5], %s124
      %s127 = sshll.u32 [#allocation4], 4
      %s128 = int_to_ptr.vmem [resolvable:$true] %s127
      %130 = dma.vmem_to_hbm [thread:$0]  %s128, 16, %s4, [#allocation5]
    $region25: #{loss_forward.3} parent=1 // pred_fallthru
      _
    // Predicated region
    $region26: #{loss_forward.3} parent=1 // pred_check
      _
    $region27: #{loss_forward.3} parent=1 // pred_check_branch
      %132 = sbr.rel (0) target = $region29
    $region28: #{loss_forward.3} parent=1 // pred_region
      %133 = dma.done [#allocation3], 16
    $region29: #{loss_forward.3} parent=1 // pred_fallthru
      _
    // Predicated region
    $region30: #{loss_forward.3} parent=1 // pred_check
      _
    $region31: #{loss_forward.3} parent=1 // pred_check_branch
      %135 = sbr.rel (0) target = $region33
    $region32: #{loss_forward.3} parent=1 // pred_region
      %136 = dma.done [#allocation5], 16
    $region33: #{loss_forward.3} parent=1 // pred_fallthru
      _
    %137 = vsyncpa [#allocation3], 1
    %138 = vsyncpa [#allocation5], 1

// kernel: loss_forward.4
$region0: #{loss_forward.4}
  #allocation0 [shape = 'u32[]', space=smem, size = 0x4, offset = 0x4, fixed_abs, tag = 'smem constant byte address 0x4 - core index']
  #allocation1 [shape = 'u32[144,128]{1,0:T(1,128)}', space=vmem, size = 0x12000, scoped, tag = 'internal scratch']
  %s0 = inlined_call_operand.vmem [shape: f32[2,8,256], index: 0, kind: input, shape index: {}]
  %s1 = inlined_call_operand.vmem [shape: s32[1,512], index: 1, kind: input, shape index: {}]
  %s2 = inlined_call_operand.vmem [shape: f32[8,512], index: 2, kind: output, shape index: {}]
  %s3 = sld [smem:[#allocation0]]
  $region41: #{loss_forward.4} parent=0
    _
  %s5 = ssub.s32 1, %s3
  %s6 = scalar_select 0, %s5, %s3
  loop: start=0, step=1, limit=4
  $region2: #{loss_forward.4} parent=0 // loop_pre_header
    _
  $region3: #{loss_forward.4} parent=0 // loop_header
    %s8 = sphi 0, %s12
    %p9 = scmp.ge.s32.totalorder %s8, 4
    %s15 = sphi 0, %s27
    %s16 = sphi 0, %s23
    %s17 = sphi 0, %s15
    %s18 = sphi 0, %s16
    %s19 = sphi 0, %s17
    %s20 = sphi 0, %s18
    %s32 = sphi 0, %s34
    %s35 = sphi 0, %s32
    %s36 = sphi 0, %s35
    %s52 = sphi 0, %s36
    %s60 = sphi 0, %s62
    %s63 = sphi 0, %s60
    %s64 = sphi 0, %s63
    %s80 = sphi 0, %s64
    %s88 = sphi 0, %s90
    %s91 = sphi 0, %s88
    %s92 = sphi 0, %s91
    %s108 = sphi 0, %s92
  $region4: #{loss_forward.4} parent=0 // loop_header_branch
    %11 = sbr.rel (%p9) target = $region8
  $region5: #{loss_forward.4} parent=0 // loop_body
    %s13 = ssub.s32 %s8, 1
    %s14 = ssub.s32 %s8, 2
    %s21 = sadd.s32 1, %s16
    %p22 = scmp.ge.s32.totalorder %s21, 1
    %s23 = scalar_select %p22, 0, %s21
    %s24 = sadd.s32 1, %s15
    %s25 = scalar_select %p22, %s24, %s15
    %p26 = scmp.ge.s32.totalorder %s25, 2
    %s27 = scalar_select %p26, 0, %s25
    %s28 = ssub.s32 %s15, %s27
    %s29 = ssub.s32 %s16, %s23
    %s30 = sor.u32 %s28, %s29
    %p31 = scmp.eq.s32.totalorder %s30, 0
    %s33 = sadd.s32 %s32, 1
    %s34 = scalar_select %p31, %s32, %s33
    %p37 = pneg %p31
    %p38 = scmp.eq.s32.totalorder %s8, 1
    %p39 = por %p37, %p38
    %p40 = scmp.ne.s32.totalorder %s32, %s35
    %p41 = scmp.eq.s32.totalorder %s8, 0
    %p42 = por %p40, %p41
    %p43 = scmp.ne.s32.totalorder %s32, %s35
    %p44 = scmp.eq.s32.totalorder %s13, 1
    %p45 = por %p43, %p44
    %p46 = scmp.ne.s32.totalorder %s35, %s36
    %p47 = scmp.eq.s32.totalorder %s13, 0
    %p48 = por %p46, %p47
    %p49 = scmp.ne.s32.totalorder %s35, %s36
    %p50 = scmp.eq.s32.totalorder %s14, 1
    %p51 = por %p49, %p50
    %p53 = scmp.ne.s32.totalorder %s36, %s52
    %p54 = scmp.eq.s32.totalorder %s14, 0
    %p55 = por %p53, %p54
    %s56 = sadd.s32 %s15, %s16
    %s57 = sadd.s32 %s27, %s23
    %s58 = ssub.s32 %s56, %s57
    %p59 = scmp.eq.s32.totalorder %s58, 0
    %s61 = sadd.s32 %s60, 1
    %s62 = scalar_select %p59, %s60, %s61
    %p65 = pneg %p59
    %p66 = scmp.eq.s32.totalorder %s8, 1
    %p67 = por %p65, %p66
    %p68 = scmp.ne.s32.totalorder %s60, %s63
    %p69 = scmp.eq.s32.totalorder %s8, 0
    %p70 = por %p68, %p69
    %p71 = scmp.ne.s32.totalorder %s60, %s63
    %p72 = scmp.eq.s32.totalorder %s13, 1
    %p73 = por %p71, %p72
    %p74 = scmp.ne.s32.totalorder %s63, %s64
    %p75 = scmp.eq.s32.totalorder %s13, 0
    %p76 = por %p74, %p75
    %p77 = scmp.ne.s32.totalorder %s63, %s64
    %p78 = scmp.eq.s32.totalorder %s14, 1
    %p79 = por %p77, %p78
    %p81 = scmp.ne.s32.totalorder %s64, %s80
    %p82 = scmp.eq.s32.totalorder %s14, 0
    %p83 = por %p81, %p82
    %s84 = sadd.s32 %s15, %s16
    %s85 = sadd.s32 %s27, %s23
    %s86 = ssub.s32 %s84, %s85
    %p87 = scmp.eq.s32.totalorder %s86, 0
    %s89 = sadd.s32 %s88, 1
    %s90 = scalar_select %p87, %s88, %s89
    %p93 = pneg %p87
    %p94 = scmp.eq.s32.totalorder %s8, 1
    %p95 = por %p93, %p94
    %p96 = scmp.ne.s32.totalorder %s88, %s91
    %p97 = scmp.eq.s32.totalorder %s8, 0
    %p98 = por %p96, %p97
    %p99 = scmp.ne.s32.totalorder %s88, %s91
    %p100 = scmp.eq.s32.totalorder %s13, 1
    %p101 = por %p99, %p100
    %p102 = scmp.ne.s32.totalorder %s91, %s92
    %p103 = scmp.eq.s32.totalorder %s13, 0
    %p104 = por %p102, %p103
    %p105 = scmp.ne.s32.totalorder %s91, %s92
    %p106 = scmp.eq.s32.totalorder %s14, 1
    %p107 = por %p105, %p106
    %p109 = scmp.ne.s32.totalorder %s92, %s108
    %p110 = scmp.eq.s32.totalorder %s14, 0
    %p111 = por %p109, %p110
    %p112 = scmp.le.s32.totalorder 1, %s8
    %p113 = scmp.lt.s32.totalorder %s8, 3
    %p114 = pnand %p112, %p113
    %p115 = pneg %p114
    // Predicated region
    $region9: #{loss_forward.4} parent=5 // pred_check
      _
    $region10: #{loss_forward.4} parent=5 // pred_check_branch
      %117 = sbr.rel (%p114) target = $region12
    $region11: #{loss_forward.4} parent=5 // pred_region
      %s118 = ssub.s32 %s8, 1
    $region12: #{loss_forward.4} parent=5 // pred_fallthru
      _
    %p119 = scmp.lt.s32.totalorder %s8, 2
    // Predicated region
    $region13: #{loss_forward.4} parent=5 // pred_check
      %p120 = pneg %p119
    $region14: #{loss_forward.4} parent=5 // pred_check_branch
      %122 = sbr.rel (%p120) target = $region16
    $region15: #{loss_forward.4} parent=5 // pred_region
      // Predicated region
      $region17: #{loss_forward.4} parent=15 // pred_check
        %p123 = pneg %p42
      $region18: #{loss_forward.4} parent=15 // pred_check_branch
        %125 = sbr.rel (%p123) target = $region20
      $region19: #{loss_forward.4} parent=15 // pred_region
        %s126 = smul.u32 2, %s16
        %p127 = scmp.lt.s32.totalorder %s15, 1
        %s128 = scalar_select %p127, %s15, 1
        %p129 = scmp.lt.s32.totalorder %s126, 1
        %s130 = scalar_select %p129, %s126, 1
        %s131 = smul.addr %s128, 2
        %s132 = sadd.s32 %s130, %s131
        %s133 = smul.addr %s132, 8
        %s134 = scalar_lea.vmem %s0, %s133
        %s135 = smul.u32 2, %s16
      $region20: #{loss_forward.4} parent=15 // pred_fallthru
        _
      // Predicated region
      $region21: #{loss_forward.4} parent=15 // pred_check
        %p136 = pneg %p70
      $region22: #{loss_forward.4} parent=15 // pred_check_branch
        %138 = sbr.rel (%p136) target = $region24
      $region23: #{loss_forward.4} parent=15 // pred_region
        %s139 = sadd.s32 %s15, %s16
        %s140 = smul.u32 2, %s139
        %p141 = scmp.lt.s32.totalorder %s140, 3
        %s142 = scalar_select %p141, %s140, 3
        %s143 = scalar_lea.vmem %s1, %s142
        %s144 = sadd.s32 %s15, %s16
        %s145 = smul.u32 2, %s144
      $region24: #{loss_forward.4} parent=15 // pred_fallthru
        _
    $region16: #{loss_forward.4} parent=5 // pred_fallthru
      _
    %p146 = scmp.le.s32.totalorder 1, %s8
    %p147 = scmp.lt.s32.totalorder %s8, 3
    %p148 = pnand %p146, %p147
    %p149 = pneg %p148
    // Predicated region
    $region25: #{loss_forward.4} parent=5 // pred_check
      _
    $region26: #{loss_forward.4} parent=5 // pred_check_branch
      %151 = sbr.rel (%p148) target = $region28
    $region27: #{loss_forward.4} parent=5 // pred_region
      %s152 = ssub.s32 %s8, 1
      %s153 = smul.u32 2, %s18
      %p154 = scmp.lt.s32.totalorder %s17, 1
      %s155 = scalar_select %p154, %s17, 1
      %p156 = scmp.lt.s32.totalorder %s153, 1
      %s157 = scalar_select %p156, %s153, 1
      %s158 = smul.addr %s155, 2
      %s159 = sadd.s32 %s157, %s158
      %s160 = smul.addr %s159, 8
      %s161 = scalar_lea.vmem %s0, %s160
      %p162 = pneg %p48
      %p163 = pneg %p45
      %s164 = sadd.s32 %s17, %s18
      %s165 = smul.u32 2, %s164
      %p166 = scmp.lt.s32.totalorder %s165, 3
      %s167 = scalar_select %p166, %s165, 3
      %s168 = scalar_lea.vmem %s1, %s167
      %p169 = pneg %p76
      %p170 = pneg %p73
      %p171 = pneg %p104
      %p172 = pneg %p101
      %s173 = sadd.s32 %s17, %s18
      %s174 = smul.u32 2, %s173
      %p175 = scmp.lt.s32.totalorder %s174, 3
      %s176 = scalar_select %p175, %s174, 3
      %s177 = smul.addr %s176, 8
      %s178 = scalar_lea.vmem %s2, %s177
      %s179 = smul.u32 2, %s18
      %p180 = scmp.lt.s32.totalorder %s17, 1
      %s181 = scalar_select %p180, %s17, 1
      %p182 = scmp.lt.s32.totalorder %s179, 1
      %s183 = scalar_select %p182, %s179, 1
      %s184 = smul.addr %s181, 2
      %s185 = sadd.s32 %s183, %s184
      %s186 = smul.addr %s185, 8
      %s187 = scalar_lea.vmem %s0, %s186
      %s188 = smul.u32 2, %s18
      %s189 = sadd.s32 %s17, %s18
      %s190 = smul.u32 2, %s189
      %p191 = scmp.lt.s32.totalorder %s190, 3
      %s192 = scalar_select %p191, %s190, 3
      %s193 = scalar_lea.vmem %s1, %s192
      %s194 = sadd.s32 %s17, %s18
      %s195 = smul.u32 2, %s194
      %s196 = sadd.s32 %s17, %s18
      %s197 = smul.u32 2, %s196
      %p198 = scmp.lt.s32.totalorder %s197, 3
      %s199 = scalar_select %p198, %s197, 3
      %s200 = smul.addr %s199, 8
      %s201 = scalar_lea.vmem %s2, %s200
      %s202 = sadd.s32 %s17, %s18
      %s203 = smul.u32 2, %s202
      %v204 = vld [vmem:[%s187] sm:$0xff]
      %v205 = vld [vmem:[%s187 + $0x8] sm:$0xff]
      %v206 = vld [vmem:[%s193] sm:$0x3]
      %v207 = vrot.slane %v204, 4
      %v208 = vmax.f32 %v204, %v207
      %v209 = vrot.slane %v208, 2
      %v210 = vmax.f32 %v208, %v209
      %v211 = vrot.slane %v210, 1
      %v212 = vmax.f32 %v210, %v211
      %v213 = vrot.slane %v205, 4
      %v214 = vmax.f32 %v205, %v213
      %v215 = vrot.slane %v214, 2
      %v216 = vmax.f32 %v214, %v215
      %v217 = vrot.slane %v216, 1
      %v218 = vmax.f32 %v216, %v217
      %v219 = vsub.f32 %v204, %v212
      %v220 = vsub.f32 %v205, %v218
      %v221 = vmul.f32 %v219, 1.442695
      %v222 = vpow.pop %v221
      %v223 = vmul.f32 %v220, 1.442695
      %v224 = vpow.pop %v223
      %v225 = vrot.slane %v222, 4
      %v226 = vadd.f32 %v222, %v225
      %v227 = vrot.slane %v226, 2
      %v228 = vadd.f32 %v226, %v227
      %v229 = vrot.slane %v228, 1
      %v230 = vadd.f32 %v228, %v229
      %v231 = vrot.slane %v224, 4
      %v232 = vadd.f32 %v224, %v231
      %v233 = vrot.slane %v232, 2
      %v234 = vadd.f32 %v232, %v233
      %v235 = vrot.slane %v234, 1
      %v236 = vadd.f32 %v234, %v235
      %v237 = vrcp.pop %v230
      %v238 = vrcp.pop %v236
      %v239 = vmul.f32 %v222, %v237
      %v240 = vmul.f32 %v224, %v238
      %v241 = vlaneseq
      %v242 = vshrl.u32 %v241, 7
      %vm243 = vcmp.ne.s32.totalorder %v206, 255
      %v244 = vlaneseq
      %v245 = vshrl.u32 %v244, 7
      %v246 = vsub.s32 0, %v245
      %v247 = vrot.slane %v206, %v246
      %v248 = vlaneseq
      %v249 = vshrl.u32 %v248, 7
      %v250 = vsub.s32 1, %v249
      %v251 = vrot.slane %v206, %v250
      %vm252 = vcmp.eq.s32.totalorder %v242, %v247
      %vm253 = vcmp.eq.s32.totalorder %v242, %v251
      %v254 = vsel %vm252, 1, 0
      %v255 = vsel %vm253, 1, 0
      %v256 = vcvt.s32.f32 %v254
      %v257 = vcvt.s32.f32 %v255
      %v258 = vsub.f32 %v256, %v239
      %v259 = vsub.f32 %v257, %v240
      %v260 = vand.u32 2147483647, %v258
      %v261 = vand.u32 2147483647, %v259
      %v262 = vsub.f32 0.0, %v260
      %v263 = vsub.f32 0.0, %v261
      %v264 = vsel %vm243, 1, 0
      %v265 = vlaneseq
      %v266 = vshrl.u32 %v265, 7
      %v267 = vsub.s32 0, %v266
      %v268 = vrot.slane %v264, %v267
      %v269 = vlaneseq
      %v270 = vshrl.u32 %v269, 7
      %v271 = vsub.s32 1, %v270
      %v272 = vrot.slane %v264, %v271
      %vm273 = vcmp.eq.s32.totalorder %v268, 1
      %vm274 = vcmp.eq.s32.totalorder %v272, 1
      %v275 = vsel %vm273, %v262, 0.0
      %v276 = vsel %vm274, %v263, 0.0
      %277 = vst [vmem:[%s201] sm:$0xff] %v275
      %278 = vst [vmem:[%s201 + $0x8] sm:$0xff] %v276
      %s279 = sadd.s32 %s17, %s18
      %s280 = smul.u32 2, %s279
      %p281 = scmp.lt.s32.totalorder %s280, 3
      %s282 = scalar_select %p281, %s280, 3
      %s283 = smul.addr %s282, 8
      %s284 = scalar_lea.vmem %s2, %s283
      // Predicated region
      $region29: #{loss_forward.4} parent=27 // pred_check
        %p285 = pneg %p101
      $region30: #{loss_forward.4} parent=27 // pred_check_branch
        %287 = sbr.rel (%p285) target = $region32
      $region31: #{loss_forward.4} parent=27 // pred_region
        %s288 = sadd.s32 %s17, %s18
        %s289 = smul.u32 2, %s288
      $region32: #{loss_forward.4} parent=27 // pred_fallthru
        _
    $region28: #{loss_forward.4} parent=5 // pred_fallthru
      _
    %p290 = scmp.le.s32.totalorder 2, %s8
    // Predicated region
    $region33: #{loss_forward.4} parent=5 // pred_check
      %p291 = pneg %p290
    $region34: #{loss_forward.4} parent=5 // pred_check_branch
      %293 = sbr.rel (%p291) target = $region36
    $region35: #{loss_forward.4} parent=5 // pred_region
      %s294 = ssub.s32 %s8, 2
      // Predicated region
      $region37: #{loss_forward.4} parent=35 // pred_check
        %p295 = pneg %p107
      $region38: #{loss_forward.4} parent=35 // pred_check_branch
        %297 = sbr.rel (%p295) target = $region40
      $region39: #{loss_forward.4} parent=35 // pred_region
        %s298 = sadd.s32 %s19, %s20
        %s299 = smul.u32 2, %s298
        %p300 = scmp.lt.s32.totalorder %s299, 3
        %s301 = scalar_select %p300, %s299, 3
        %s302 = smul.addr %s301, 8
        %s303 = scalar_lea.vmem %s2, %s302
      $region40: #{loss_forward.4} parent=35 // pred_fallthru
        _
    $region36: #{loss_forward.4} parent=5 // pred_fallthru
      _
  $region6: #{loss_forward.4} parent=0 // loop_footer
    %s12 = sadd.s32 1, %s8
  $region7: #{loss_forward.4} parent=0 // loop_footer_branch
    %7 = sbr.rel target = $region3
  $region8: #{loss_forward.4} parent=0 // loop_exit
    _

// kernel: loss_forward.5
$region0: #{loss_forward.5}
  #allocation0 [shape = 'u32[]', space=smem, size = 0x4, offset = 0x4, fixed_abs, tag = 'smem constant byte address 0x4 - core index']
  #allocation1 [shape = 'u32[144,128]{1,0:T(1,128)}', space=vmem, size = 0x12000, scoped, tag = 'internal scratch']
  #allocation2 [shape = 'f32[8,1]{1,0:T(8,128)}', space=vmem, size = 0x1000, scoped, tag = 'scratch operand']
  #allocation3 [shape = 'f32[8,1]{1,0:T(8,128)}', space=vmem, size = 0x1000, scoped, tag = 'scratch operand']
  %s0 = inlined_call_operand.vmem [shape: f32[8,512], index: 0, kind: input, shape index: {}]
  %s1 = inlined_call_operand.vmem [shape: s32[8,512], index: 1, kind: input, shape index: {}]
  %s2 = inlined_call_operand.vmem [shape: f32[8,1], index: 2, kind: input, shape index: {}]
  %s3 = inlined_call_operand.vmem [shape: f32[8,1], index: 3, kind: output, shape index: {}]
  %s4 = sld [smem:[#allocation0]]
  $region26: #{loss_forward.5} parent=0
    _
  %s6 = ssub.s32 1, %s4
  %s7 = scalar_select 0, %s6, %s4
  // Predicated region
  $region2: #{loss_forward.5} parent=0 // pred_check
    _
  $region3: #{loss_forward.5} parent=0 // pred_check_branch
    %9 = sbr.rel (0) target = $region5
  $region4: #{loss_forward.5} parent=0 // pred_region
    _
  $region5: #{loss_forward.5} parent=0 // pred_fallthru
    _
  // Predicated region
  $region6: #{loss_forward.5} parent=0 // pred_check
    _
  $region7: #{loss_forward.5} parent=0 // pred_check_branch
    %11 = sbr.rel (0) target = $region9
  $region8: #{loss_forward.5} parent=0 // pred_region
    _
  $region9: #{loss_forward.5} parent=0 // pred_fallthru
    _
  // Predicated region
  $region10: #{loss_forward.5} parent=0 // pred_check
    _
  $region11: #{loss_forward.5} parent=0 // pred_check_branch
    %13 = sbr.rel (0) target = $region13
  $region12: #{loss_forward.5} parent=0 // pred_region
    _
  $region13: #{loss_forward.5} parent=0 // pred_fallthru
    _
  %p14 = scmp.eq.s32.totalorder 0, 0
  // Predicated region
  $region14: #{loss_forward.5} parent=0 // pred_check
    %p15 = pneg %p14
  $region15: #{loss_forward.5} parent=0 // pred_check_branch
    %17 = sbr.rel (%p15) target = $region17
  $region16: #{loss_forward.5} parent=0 // pred_region
    %vm18 = vcmask 7168
    %19 = vst.msk [vmem:[%s3] sm:$0xff] %vm18, 0.0
    %20 = vst.msk [vmem:[#allocation2] sm:$0xff] %vm18, 0.0
    %21 = vst.msk [vmem:[#allocation3] sm:$0xff] %vm18, 0.0
  $region17: #{loss_forward.5} parent=0 // pred_fallthru
    _
  %v22 = vld [vmem:[%s0] sm:$0xff]
  %v23 = vld [vmem:[%s0 + $0x8] sm:$0xff]
  %v24 = vld [vmem:[%s0 + $0x10] sm:$0xff]
  %v25 = vld [vmem:[%s0 + $0x18] sm:$0xff]
  %v26 = vld [vmem:[%s1] sm:$0xff]
  %v27 = vld [vmem:[%s1 + $0x8] sm:$0xff]
  %v28 = vld [vmem:[%s1 + $0x10] sm:$0xff]
  %v29 = vld [vmem:[%s1 + $0x18] sm:$0xff]
  %v30 = vlaneseq
  %v31 = vshrl.u32 %v30, 7
  %v32 = vlaneseq
  %v33 = vand.u32 %v32, 127
  %v34 = vadd.s32 %v33, 128
  %v35 = vadd.s32 %v33, 256
  %v36 = vadd.s32 %v33, 384
  %vm37 = vcmp.eq.s32.totalorder %v26, %v31
  %vm38 = vcmp.eq.s32.totalorder %v27, %v31
  %vm39 = vcmp.eq.s32.totalorder %v28, %v31
  %vm40 = vcmp.eq.s32.totalorder %v29, %v31
  %v41 = vsel %vm37, 1, 0
  %v42 = vsel %vm38, 1, 0
  %v43 = vsel %vm39, 1, 0
  %v44 = vsel %vm40, 1, 0
  %v45 = vcvt.s32.f32 %v41
  %v46 = vcvt.s32.f32 %v42
  %v47 = vcvt.s32.f32 %v43
  %v48 = vcvt.s32.f32 %v44
  %vm49 = vcmp.ge.s32.totalorder %v33, 1
  %vm50 = vcmp.ge.s32.totalorder %v34, 1
  %vm51 = vcmp.ge.s32.totalorder %v35, 1
  %vm52 = vcmp.ge.s32.totalorder %v36, 1
  %53 = vrot.lane.b32.xlu0 %v45, 1
  %v54 = vpop.permute.xlu0 %53
  %55 = vrot.lane.b32.xlu0 %v46, 1
  %v56 = vpop.permute.xlu0 %55
  %57 = vrot.lane.b32.xlu0 %v47, 1
  %v58 = vpop.permute.xlu0 %57
  %59 = vrot.lane.b32.xlu0 %v48, 1
  %v60 = vpop.permute.xlu0 %59
  %vm61 = vcmp.lt.s32.totalorder %v33, 1
  %v62 = vsel %vm61, %v58, %v60
  %v63 = vsel %vm61, %v56, %v58
  %v64 = vsel %vm61, %v54, %v56
  %v65 = vsel %vm61, %v60, %v54
  %v66 = vsel %vm49, %v65, 0.0
  %v67 = vsel %vm50, %v64, 0.0
  %v68 = vsel %vm51, %v63, 0.0
  %v69 = vsel %vm52, %v62, 0.0
  %v70 = vadd.f32 %v45, %v66
  %v71 = vadd.f32 %v46, %v67
  %v72 = vadd.f32 %v47, %v68
  %v73 = vadd.f32 %v48, %v69
  %vm74 = vcmp.ge.s32.totalorder %v33, 2
  %vm75 = vcmp.ge.s32.totalorder %v34, 2
  %vm76 = vcmp.ge.s32.totalorder %v35, 2
  %vm77 = vcmp.ge.s32.totalorder %v36, 2
  %78 = vrot.lane.b32.xlu0 %v70, 2
  %v79 = vpop.permute.xlu0 %78
  %80 = vrot.lane.b32.xlu0 %v71, 2
  %v81 = vpop.permute.xlu0 %80
  %82 = vrot.lane.b32.xlu0 %v72, 2
  %v83 = vpop.permute.xlu0 %82
  %84 = vrot.lane.b32.xlu0 %v73, 2
  %v85 = vpop.permute.xlu0 %84
  %vm86 = vcmp.lt.s32.totalorder %v33, 2
  %v87 = vsel %vm86, %v83, %v85
  %v88 = vsel %vm86, %v81, %v83
  %v89 = vsel %vm86, %v79, %v81
  %v90 = vsel %vm86, %v85, %v79
  %v91 = vsel %vm74, %v90, 0.0
  %v92 = vsel %vm75, %v89, 0.0
  %v93 = vsel %vm76, %v88, 0.0
  %v94 = vsel %vm77, %v87, 0.0
  %v95 = vadd.f32 %v70, %v91
  %v96 = vadd.f32 %v71, %v92
  %v97 = vadd.f32 %v72, %v93
  %v98 = vadd.f32 %v73, %v94
  %vm99 = vcmp.ge.s32.totalorder %v33, 4
  %vm100 = vcmp.ge.s32.totalorder %v34, 4
  %vm101 = vcmp.ge.s32.totalorder %v35, 4
  %vm102 = vcmp.ge.s32.totalorder %v36, 4
  %103 = vrot.lane.b32.xlu0 %v95, 4
  %v104 = vpop.permute.xlu0 %103
  %105 = vrot.lane.b32.xlu0 %v96, 4
  %v106 = vpop.permute.xlu0 %105
  %107 = vrot.lane.b32.xlu0 %v97, 4
  %v108 = vpop.permute.xlu0 %107
  %109 = vrot.lane.b32.xlu0 %v98, 4
  %v110 = vpop.permute.xlu0 %109
  %vm111 = vcmp.lt.s32.totalorder %v33, 4
  %v112 = vsel %vm111, %v108, %v110
  %v113 = vsel %vm111, %v106, %v108
  %v114 = vsel %vm111, %v104, %v106
  %v115 = vsel %vm111, %v110, %v104
  %v116 = vsel %vm99, %v115, 0.0
  %v117 = vsel %vm100, %v114, 0.0
  %v118 = vsel %vm101, %v113, 0.0
  %v119 = vsel %vm102, %v112, 0.0
  %v120 = vadd.f32 %v95, %v116
  %v121 = vadd.f32 %v96, %v117
  %v122 = vadd.f32 %v97, %v118
  %v123 = vadd.f32 %v98, %v119
  %vm124 = vcmp.ge.s32.totalorder %v33, 8
  %vm125 = vcmp.ge.s32.totalorder %v34, 8
  %vm126 = vcmp.ge.s32.totalorder %v35, 8
  %vm127 = vcmp.ge.s32.totalorder %v36, 8
  %128 = vrot.lane.b32.xlu0 %v120, 8
  %v129 = vpop.permute.xlu0 %128
  %130 = vrot.lane.b32.xlu0 %v121, 8
  %v131 = vpop.permute.xlu0 %130
  %132 = vrot.lane.b32.xlu0 %v122, 8
  %v133 = vpop.permute.xlu0 %132
  %134 = vrot.lane.b32.xlu0 %v123, 8
  %v135 = vpop.permute.xlu0 %134
  %vm136 = vcmp.lt.s32.totalorder %v33, 8
  %v137 = vsel %vm136, %v133, %v135
  %v138 = vsel %vm136, %v131, %v133
  %v139 = vsel %vm136, %v129, %v131
  %v140 = vsel %vm136, %v135, %v129
  %v141 = vsel %vm124, %v140, 0.0
  %v142 = vsel %vm125, %v139, 0.0
  %v143 = vsel %vm126, %v138, 0.0
  %v144 = vsel %vm127, %v137, 0.0
  %v145 = vadd.f32 %v120, %v141
  %v146 = vadd.f32 %v121, %v142
  %v147 = vadd.f32 %v122, %v143
  %v148 = vadd.f32 %v123, %v144
  %vm149 = vcmp.ge.s32.totalorder %v33, 16
  %vm150 = vcmp.ge.s32.totalorder %v34, 16
  %vm151 = vcmp.ge.s32.totalorder %v35, 16
  %vm152 = vcmp.ge.s32.totalorder %v36, 16
  %153 = vrot.lane.b32.xlu0 %v145, 16
  %v154 = vpop.permute.xlu0 %153
  %155 = vrot.lane.b32.xlu0 %v146, 16
  %v156 = vpop.permute.xlu0 %155
  %157 = vrot.lane.b32.xlu0 %v147, 16
  %v158 = vpop.permute.xlu0 %157
  %159 = vrot.lane.b32.xlu0 %v148, 16
  %v160 = vpop.permute.xlu0 %159
  %vm161 = vcmp.lt.s32.totalorder %v33, 16
  %v162 = vsel %vm161, %v158, %v160
  %v163 = vsel %vm161, %v156, %v158
  %v164 = vsel %vm161, %v154, %v156
  %v165 = vsel %vm161, %v160, %v154
  %v166 = vsel %vm149, %v165, 0.0
  %v167 = vsel %vm150, %v164, 0.0
  %v168 = vsel %vm151, %v163, 0.0
  %v169 = vsel %vm152, %v162, 0.0
  %v170 = vadd.f32 %v145, %v166
  %v171 = vadd.f32 %v146, %v167
  %v172 = vadd.f32 %v147, %v168
  %v173 = vadd.f32 %v148, %v169
  %vm174 = vcmp.ge.s32.totalorder %v33, 32
  %vm175 = vcmp.ge.s32.totalorder %v34, 32
  %vm176 = vcmp.ge.s32.totalorder %v35, 32
  %vm177 = vcmp.ge.s32.totalorder %v36, 32
  %178 = vrot.lane.b32.xlu0 %v170, 32
  %v179 = vpop.permute.xlu0 %178
  %180 = vrot.lane.b32.xlu0 %v171, 32
  %v181 = vpop.permute.xlu0 %180
  %182 = vrot.lane.b32.xlu0 %v172, 32
  %v183 = vpop.permute.xlu0 %182
  %184 = vrot.lane.b32.xlu0 %v173, 32
  %v185 = vpop.permute.xlu0 %184
  %vm186 = vcmp.lt.s32.totalorder %v33, 32
  %v187 = vsel %vm186, %v183, %v185
  %v188 = vsel %vm186, %v181, %v183
  %v189 = vsel %vm186, %v179, %v181
  %v190 = vsel %vm186, %v185, %v179
  %v191 = vsel %vm174, %v190, 0.0
  %v192 = vsel %vm175, %v189, 0.0
  %v193 = vsel %vm176, %v188, 0.0
  %v194 = vsel %vm177, %v187, 0.0
  %v195 = vadd.f32 %v170, %v191
  %v196 = vadd.f32 %v171, %v192
  %v197 = vadd.f32 %v172, %v193
  %v198 = vadd.f32 %v173, %v194
  %vm199 = vcmp.ge.s32.totalorder %v33, 64
  %vm200 = vcmp.ge.s32.totalorder %v34, 64
  %vm201 = vcmp.ge.s32.totalorder %v35, 64
  %vm202 = vcmp.ge.s32.totalorder %v36, 64
  %203 = vrot.lane.b32.xlu0 %v195, 64
  %v204 = vpop.permute.xlu0 %203
  %205 = vrot.lane.b32.xlu0 %v196, 64
  %v206 = vpop.permute.xlu0 %205
  %207 = vrot.lane.b32.xlu0 %v197, 64
  %v208 = vpop.permute.xlu0 %207
  %209 = vrot.lane.b32.xlu0 %v198, 64
  %v210 = vpop.permute.xlu0 %209
  %vm211 = vcmp.lt.s32.totalorder %v33, 64
  %v212 = vsel %vm211, %v208, %v210
  %v213 = vsel %vm211, %v206, %v208
  %v214 = vsel %vm211, %v204, %v206
  %v215 = vsel %vm211, %v210, %v204
  %v216 = vsel %vm199, %v215, 0.0
  %v217 = vsel %vm200, %v214, 0.0
  %v218 = vsel %vm201, %v213, 0.0
  %v219 = vsel %vm202, %v212, 0.0
  %v220 = vadd.f32 %v195, %v216
  %v221 = vadd.f32 %v196, %v217
  %v222 = vadd.f32 %v197, %v218
  %v223 = vadd.f32 %v198, %v219
  %vm224 = vcmp.ge.s32.totalorder %v33, 128
  %vm225 = vcmp.ge.s32.totalorder %v34, 128
  %vm226 = vcmp.ge.s32.totalorder %v35, 128
  %vm227 = vcmp.ge.s32.totalorder %v36, 128
  %v228 = vsel %vm224, %v223, 0.0
  %v229 = vsel %vm225, %v220, 0.0
  %v230 = vsel %vm226, %v221, 0.0
  %v231 = vsel %vm227, %v222, 0.0
  %v232 = vadd.f32 %v220, %v228
  %v233 = vadd.f32 %v221, %v229
  %v234 = vadd.f32 %v222, %v230
  %v235 = vadd.f32 %v223, %v231
  %vm236 = vcmp.ge.s32.totalorder %v33, 256
  %vm237 = vcmp.ge.s32.totalorder %v34, 256
  %vm238 = vcmp.ge.s32.totalorder %v35, 256
  %vm239 = vcmp.ge.s32.totalorder %v36, 256
  %v240 = vsel %vm236, %v234, 0.0
  %v241 = vsel %vm237, %v235, 0.0
  %v242 = vsel %vm238, %v232, 0.0
  %v243 = vsel %vm239, %v233, 0.0
  %v244 = vadd.f32 %v232, %v240
  %v245 = vadd.f32 %v233, %v241
  %v246 = vadd.f32 %v234, %v242
  %v247 = vadd.f32 %v235, %v243
  %v248 = vld [vmem:[#allocation2] sm:$0xff]
  %250 = vset.pattern.permute.xlu0 0
  %251 = vperm.xlu0 %250, %v248
  %v252 = vpop.permute.xlu0 %251
  %v254 = vadd.f32 %v244, %v252
  %v255 = vadd.f32 %v245, %v252
  %v256 = vadd.f32 %v246, %v252
  %v257 = vadd.f32 %v247, %v252
  %v258 = vld [vmem:[%s2] sm:$0xff]
  %s259 = smul.u32 0, 512
  %v260 = vstv %s259
  %v261 = vadd.s32 %v260, %v33
  %v262 = vadd.s32 %v260, %v34
  %v263 = vadd.s32 %v260, %v35
  %v264 = vadd.s32 %v260, %v36
  %v265 = vadd.s32 %v261, 1
  %v266 = vadd.s32 %v262, 1
  %v267 = vadd.s32 %v263, 1
  %v268 = vadd.s32 %v264, 1
  %v269 = vcvt.s32.f32 %v265
  %v270 = vcvt.s32.f32 %v266
  %v271 = vcvt.s32.f32 %v267
  %v272 = vcvt.s32.f32 %v268
  %274 = vset.pattern.permute.xlu0 0
  %275 = vperm.xlu0 %274, %v258
  %v276 = vpop.permute.xlu0 %275
  %v278 = vsub.f32 %v276, %v254
  %v279 = vsub.f32 %v276, %v255
  %v280 = vsub.f32 %v276, %v256
  %v281 = vsub.f32 %v276, %v257
  %v282 = vsub.f32 %v269, %v254
  %v283 = vsub.f32 %v270, %v255
  %v284 = vsub.f32 %v271, %v256
  %v285 = vsub.f32 %v272, %v257
  %v286 = vadd.f32 %v276, %v282
  %v287 = vadd.f32 %v276, %v283
  %v288 = vadd.f32 %v276, %v284
  %v289 = vadd.f32 %v276, %v285
  %v290 = vrcp.pop %v286
  %v291 = vrcp.pop %v287
  %v292 = vrcp.pop %v288
  %v293 = vrcp.pop %v289
  %v294 = vmul.f32 %v278, %v290
  %v295 = vmul.f32 %v279, %v291
  %v296 = vmul.f32 %v280, %v292
  %v297 = vmul.f32 %v281, %v293
  %v298 = vsub.f32 1.0, %v294
  %v299 = vsub.f32 1.0, %v295
  %v300 = vsub.f32 1.0, %v296
  %v301 = vsub.f32 1.0, %v297
  %vm302 = vcmp.eq.s32.totalorder %v33, 0
  %vm303 = vcmp.eq.s32.totalorder %v34, 0
  %vm304 = vcmp.eq.s32.totalorder %v35, 0
  %vm305 = vcmp.eq.s32.totalorder %v36, 0
  %v306 = vld [vmem:[#allocation3] sm:$0xff]
  %307 = vrot.lane.b32.xlu0 %v298, 1
  %v308 = vpop.permute.xlu0 %307
  %309 = vrot.lane.b32.xlu0 %v299, 1
  %v310 = vpop.permute.xlu0 %309
  %311 = vrot.lane.b32.xlu0 %v300, 1
  %v312 = vpop.permute.xlu0 %311
  %313 = vrot.lane.b32.xlu0 %v301, 1
  %v314 = vpop.permute.xlu0 %313
  %v315 = vsel %vm61, %v312, %v314
  %v316 = vsel %vm61, %v310, %v312
  %v317 = vsel %vm61, %v308, %v310
  %v318 = vsel %vm61, %v314, %v308
  %320 = vset.pattern.permute.xlu0 0
  %321 = vperm.xlu0 %320, %v306
  %v322 = vpop.permute.xlu0 %321
  %v324 = vsel %vm302, %v322, %v318
  %v325 = vsel %vm303, %v322, %v317
  %v326 = vsel %vm304, %v322, %v316
  %v327 = vsel %vm305, %v322, %v315
  %v328 = vsub.f32 %v298, %v324
  %v329 = vsub.f32 %v299, %v325
  %v330 = vsub.f32 %v300, %v326
  %v331 = vsub.f32 %v301, %v327
  %v332 = vld [vmem:[%s3] sm:$0xff]
  %v333 = vsub.f32 0.0, %v22
  %v334 = vsub.f32 0.0, %v23
  %v335 = vsub.f32 0.0, %v24
  %v336 = vsub.f32 0.0, %v25
  %v337 = vmul.f32 %v333, %v328
  %v338 = vmul.f32 %v334, %v329
  %v339 = vmul.f32 %v335, %v330
  %v340 = vmul.f32 %v336, %v331
  %v341 = vadd.f32 %v337, %v338
  %v342 = vadd.f32 %v341, %v339
  %v343 = vadd.f32 %v342, %v340
  %344 = vadd.xlane.f32.xlu0 %v343
  %v345 = vpop.xlane.xlu0 %344
  %v346 = vadd.f32 %v332, %v345
  %vm347 = vcmask 7168
  %348 = vst.msk [vmem:[%s3] sm:$0xff] %vm347, %v346
  %vm349 = vcmp.eq.s32.totalorder %v33, 511
  %vm350 = vcmp.eq.s32.totalorder %v34, 511
  %vm351 = vcmp.eq.s32.totalorder %v35, 511
  %vm352 = vcmp.eq.s32.totalorder %v36, 511
  %v353 = vsel %vm349, %v254, 0.0
  %v354 = vsel %vm350, %v255, 0.0
  %v355 = vsel %vm351, %v256, 0.0
  %v356 = vsel %vm352, %v257, 0.0
  %v357 = vadd.f32 %v353, %v354
  %v358 = vadd.f32 %v357, %v355
  %v359 = vadd.f32 %v358, %v356
  %360 = vadd.xlane.f32.xlu0 %v359
  %v361 = vpop.xlane.xlu0 %360
  %362 = vst.msk [vmem:[#allocation2] sm:$0xff] %vm347, %v361
  %v363 = vsel %vm349, %v298, 0.0
  %v364 = vsel %vm350, %v299, 0.0
  %v365 = vsel %vm351, %v300, 0.0
  %v366 = vsel %vm352, %v301, 0.0
  %v367 = vadd.f32 %v363, %v364
  %v368 = vadd.f32 %v367, %v365
  %v369 = vadd.f32 %v368, %v366
  %370 = vadd.xlane.f32.xlu0 %v369
  %v371 = vpop.xlane.xlu0 %370
  %372 = vst.msk [vmem:[#allocation3] sm:$0xff] %vm347, %v371
  // Predicated region
  $region18: #{loss_forward.5} parent=0 // pred_check
    _
  $region19: #{loss_forward.5} parent=0 // pred_check_branch
    %374 = sbr.rel (0) target = $region21
  $region20: #{loss_forward.5} parent=0 // pred_region
    _
  $region21: #{loss_forward.5} parent=0 // pred_fallthru
    _
  // Predicated region
  $region22: #{loss_forward.5} parent=0 // pred_check
    _
  $region23: #{loss_forward.5} parent=0 // pred_check_branch
    %376 = sbr.rel (0) target = $region25
  $region24: #{loss_forward.5} parent=0 // pred_region
    _
  $region25: #{loss_forward.5} parent=0 // pred_fallthru
    _

</llo_original>
